<compile_context>
chip_gen: v6e
topology: v6e:2x2x1
jax: 0.10.0
libtpu: 0.0.40
codegen_flags: <defaults>
</compile_context>

<pallas_src>
import functools
import math

import jax
import jax.numpy as jnp
from jax.experimental import pallas as pl
from jax.experimental.pallas import tpu as pltpu


def _round_up(x, m):
    return (x + m - 1) // m * m


def _nbytes(shape, dtype):
    return math.prod(shape) * jnp.dtype(dtype).itemsize


def _vmem_limit(need_bytes):
    # need_bytes already counts double-buffered operands + scratch; add compiler
    # headroom and clamp to a range that is safe on v7x (64 MiB VMEM per TC).
    return int(min(max(need_bytes + (8 << 20), 32 << 20), 56 << 20))


def _const_spec(arr):
    return pl.BlockSpec(arr.shape, lambda b, i: (0,) * arr.ndim)


# ----------------------------------------------------------------------------
# Stage 1: 3x3 / stride-2 / pad-1 conv (Cin=3) + folded BN + ReLU.
# One im2col matmul (K = 27 -> 32) per row tile.
# ----------------------------------------------------------------------------
def _stage1_kernel(im_ref, w_ref, scale_ref, shift_ref, o_ref):
    acc = jnp.dot(im_ref[0], w_ref[...], preferred_element_type=jnp.float32)
    y = jnp.maximum(acc * scale_ref[...] + shift_ref[...], 0.0)
    o_ref[0] = y.astype(o_ref.dtype)


def _stage1(x, w1k, scale1, shift1, *, tm_max=2048):
    """x: (B, H, W, 3); w1k: (32, c1p) bf16 (tap-major K); scale/shift: (1, c1p).
    Returns (B, n_tiles*TM, c1p) bf16; valid rows are the first (H//2)*(W//2)."""
    B, H, W, Cin = x.shape
    H1, W1 = H // 2, W // 2
    rows = H1 * W1
    K, C1 = w1k.shape

    # Tiny im2col at output resolution (with Cin=3 this is ~2x the input bytes,
    # so the "no HBM im2col" rationale of stage 2 does not apply here).
    xp = jnp.pad(x.astype(jnp.bfloat16), ((0, 0), (1, 1), (1, 1), (0, 0)))
    cols = [xp[:, kh:kh + 2 * H1:2, kw:kw + 2 * W1:2, :]
            for kh in range(3) for kw in range(3)]
    im = jnp.concatenate(cols, axis=-1).reshape(B, rows, 9 * Cin)
    im = jnp.pad(im, ((0, 0), (0, 0), (0, K - 9 * Cin)))

    TM = min(_round_up(rows, 16), _round_up(tm_max, 16))
    n_tiles = -(-rows // TM)
    im = jnp.pad(im, ((0, 0), (0, n_tiles * TM - rows), (0, 0)))

    need = 2 * (_nbytes((1, TM, K), jnp.bfloat16)
                + _nbytes(w1k.shape, jnp.bfloat16)
                + 2 * _nbytes(scale1.shape, jnp.float32)
                + _nbytes((1, TM, C1), jnp.bfloat16))

    return pl.pallas_call(
        _stage1_kernel,
        out_shape=jax.ShapeDtypeStruct((B, n_tiles * TM, C1), jnp.bfloat16),
        grid=(B, n_tiles),
        in_specs=[pl.BlockSpec((1, TM, K), lambda b, i: (b, i, 0)),
                  _const_spec(w1k), _const_spec(scale1), _const_spec(shift1)],
        out_specs=pl.BlockSpec((1, TM, C1), lambda b, i: (b, i, 0)),
        compiler_params=pltpu.CompilerParams(
            dimension_semantics=("parallel", "parallel"),
            vmem_limit_bytes=_vmem_limit(need)),
    )(im, w1k, scale1, shift1)


# ----------------------------------------------------------------------------
# Stage 2 (+ fused stage 3): 3x3 / stride-2 / pad-1 conv + BN + ReLU + 1x1 conv.
#
# The activation is fed as channel-stacked space-to-depth phases
#   ph[:, a*Wop + b, k*C1:(k+1)*C1] = x_pad[2a+p(k), 2b+q(k), :]
# with phase order k: 0=(1,0), 1=(0,0), 2=(0,1), 3=(1,1).  Grouping the 9 conv
# taps by their flat row offset gives 4 matmuls per tile:
#   offset 0      lanes [0:4C1)   taps (1,0),(0,0),(0,1),(1,1)
#   offset 1      lanes [0:2C1)   taps (1,2),(0,2)
#   offset Wop    lanes [C1:3C1)  taps (2,0),(2,1)
#   offset Wop+1  lanes [C1:2C1)  tap  (2,2)
# Each group reads a static row-shifted window of one contiguous
# (TM + HB, 4*C1) scratch (main tile + halo), no per-tap concatenation.
# ----------------------------------------------------------------------------
def _stage23_kernel(main_ref, halo_ref, w0_ref, w1_ref, w2_ref, w3_ref,
                    scale_ref, shift_ref, wp_ref, bp_ref, o_ref, win_ref, *,
                    wop):
    tm = main_ref.shape[1]
    hb = halo_ref.shape[1]
    c1 = w3_ref.shape[0]

    # One contiguous row window per tile (single bulk copy, aligned stores).
    win_ref[0:tm, :] = main_ref[0]
    win_ref[tm:tm + hb, :] = halo_ref[0]

    # 3x3/s2 conv as 4 offset-grouped matmuls; acc starts from the first dot.
    acc = jnp.dot(win_ref[0:tm, :], w0_ref[...],
                  preferred_element_type=jnp.float32)                 # K = 4*c1
    acc = acc + jnp.dot(win_ref[1:1 + tm, 0:2 * c1], w1_ref[...],
                        preferred_element_type=jnp.float32)           # K = 2*c1
    acc = acc + jnp.dot(win_ref[wop:wop + tm, c1:3 * c1], w2_ref[...],
                        preferred_element_type=jnp.float32)           # K = 2*c1
    acc = acc + jnp.dot(win_ref[wop + 1:wop + 1 + tm, c1:2 * c1], w3_ref[...],
                        preferred_element_type=jnp.float32)           # K =   c1

    y = jnp.maximum(acc * scale_ref[...] + shift_ref[...], 0.0)
    z = jnp.dot(y.astype(jnp.bfloat16), wp_ref[...],
                preferred_element_type=jnp.float32) + bp_ref[...]
    o_ref[0] = z.astype(o_ref.dtype)


def _stage23(a1, w_groups, scale2, shift2, wp, bp, *, tm_max=1024,
             out_dtype=jnp.float32):
    """a1: (B, H1, W1, c1p) bf16.  Returns ((B, n_tiles*TM, Ep), (Hop, Wop, rows))."""
    B, H1, W1, C1 = a1.shape
    Hop, Wop = H1 // 2 + 1, W1 // 2 + 1
    rows = Hop * Wop
    Ep = wp.shape[1]
    w0, w1, w2, w3 = w_groups

    # Phase decomposition of the zero-padded activation, channel-stacked in the
    # order [ph(1,0), ph(0,0), ph(0,1), ph(1,1)] (strided slices + one concat;
    # ~1x activation bytes, no 9x im2col).
    xp = jnp.pad(a1, ((0, 0), (1, 1), (1, 1), (0, 0)))
    ph = jnp.concatenate([xp[:, 1::2, 0::2, :], xp[:, 0::2, 0::2, :],
                          xp[:, 0::2, 1::2, :], xp[:, 1::2, 1::2, :]],
                         axis=-1).reshape(B, rows, 4 * C1)

    # Halo must cover the largest offset (Wop + 1) and divide TM; multiples of
    # 16 keep the bf16 sublane tiling aligned for the scratch copy.
    HB = _round_up(Wop + 1, 16)
    TM = min(_round_up(rows, HB), _round_up(tm_max, HB))
    n_tiles = -(-rows // TM)
    R = n_tiles * TM + HB
    ph = jnp.pad(ph, ((0, 0), (0, R - rows), (0, 0)))

    main_spec = pl.BlockSpec((1, TM, 4 * C1), lambda b, i: (b, i, 0))
    halo_spec = pl.BlockSpec((1, HB, 4 * C1),
                             lambda b, i: (b, (i + 1) * (TM // HB), 0))
    out_spec = pl.BlockSpec((1, TM, Ep), lambda b, i: (b, i, 0))

    need = 2 * (_nbytes((1, TM, 4 * C1), jnp.bfloat16)
                + _nbytes((1, HB, 4 * C1), jnp.bfloat16)
                + sum(_nbytes(w.shape, jnp.bfloat16) for w in w_groups)
                + _nbytes(wp.shape, jnp.bfloat16)
                + 2 * _nbytes(scale2.shape, jnp.float32)
                + _nbytes(bp.shape, jnp.float32)
                + _nbytes((1, TM, Ep), out_dtype))
    need += _nbytes((TM + HB, 4 * C1), jnp.bfloat16)

    out = pl.pallas_call(
        functools.partial(_stage23_kernel, wop=Wop),
        out_shape=jax.ShapeDtypeStruct((B, n_tiles * TM, Ep), out_dtype),
        # Both axes "parallel": B * n_tiles programs are split across the two
        # v7x TensorCores (keep it >= 2 / even for good megacore balance).
        grid=(B, n_tiles),
        in_specs=[main_spec, halo_spec, _const_spec(w0), _const_spec(w1),
                  _const_spec(w2), _const_spec(w3), _const_spec(scale2),
                  _const_spec(shift2), _const_spec(wp), _const_spec(bp)],
        out_specs=out_spec,
        scratch_shapes=[pltpu.VMEM((TM + HB, 4 * C1), jnp.bfloat16)],
        compiler_params=pltpu.CompilerParams(
            dimension_semantics=("parallel", "parallel"),
            vmem_limit_bytes=_vmem_limit(need)),
    )(ph, ph, w0, w1, w2, w3, scale2, shift2, wp, bp)
    return out, (Hop, Wop, rows)


# ----------------------------------------------------------------------------
# ConvStem forward
# ----------------------------------------------------------------------------
def conv_stem_forward(x_nchw, params, embed_dim, *, out_dtype=jnp.float32):
    # out_dtype=jnp.bfloat16 halves the stage-2 writeback / output VMEM if the
    # downstream transformer tolerates it; default f32 preserves module dtype.
    x = jnp.transpose(x_nchw, (0, 2, 3, 1)).astype(jnp.float32)   # NCHW -> NHWC
    B, H, W, _ = x.shape
    assert H % 4 == 0 and W % 4 == 0, (H, W)
    H1, W1 = H // 2, W // 2
    Ho, Wo = H1 // 2, W1 // 2

    # Stage 1: Conv2d(3, E/8, 3x3, s=2, p=1, bias=False) + BN + ReLU.
    a1 = _stage1(x, params["w1k"], params["scale1"], params["shift1"],
                 tm_max=2048)
    a1 = a1[:, :H1 * W1, :].reshape(B, H1, W1, -1)

    # Stage 2+3 fused: Conv2d(E/8, E/4, 3x3, s=2, p=1) + BN + ReLU, then
    # Conv2d(E/4, E, 1x1, bias=True) inside the same kernel.
    y, (Hop, Wop, rows) = _stage23(
        a1, (params["w2g0"], params["w2g1"], params["w2g2"], params["w2g3"]),
        params["scale2"], params["shift2"], params["wpk"], params["bpk"],
        tm_max=1024, out_dtype=out_dtype)

    # Strip inflated / ragged rows and channel padding.  flatten(2).transpose(1,2)
    # of NCHW == NHWC flattened over (H, W); self.norm is nn.Identity().
    y = y[:, :rows].reshape(B, Hop, Wop, -1)[:, :Ho, :Wo, :embed_dim]
    return y.reshape(B, Ho * Wo, embed_dim)


# ----------------------------------------------------------------------------
# Pure-JAX reference (f32, highest precision) for the correctness check.
# ----------------------------------------------------------------------------
def conv_stem_reference(x_nchw, params, embed_dim):
    x = jnp.transpose(x_nchw, (0, 2, 3, 1)).astype(jnp.float32)

    def conv(y, w_oihw, stride, pad):
        return jax.lax.conv_general_dilated(
            y, jnp.transpose(w_oihw, (2, 3, 1, 0)), (stride, stride),
            ((pad, pad), (pad, pad)),
            dimension_numbers=("NHWC", "HWIO", "NHWC"),
            precision=jax.lax.Precision.HIGHEST)

    y = jnp.maximum(conv(x, params["ref_w1"], 2, 1) * params["ref_scale1"]
                    + params["ref_shift1"], 0.0)
    y = jnp.maximum(conv(y, params["ref_w2"], 2, 1) * params["ref_scale2"]
                    + params["ref_shift2"], 0.0)
    y = conv(y, params["ref_w3"], 1, 0) + params["ref_b3"]
    B, Ho, Wo, E = y.shape
    return y.reshape(B, Ho * Wo, E)


# ----------------------------------------------------------------------------
# Deterministic parameter construction (synthetic; matches module shapes).
# ----------------------------------------------------------------------------
def make_params(key, embed_dim):
    c1, c2, E = embed_dim // 8, embed_dim // 4, embed_dim
    eps = 1e-5
    ks = jax.random.split(key, 6)

    def conv_w(k, cout, cin, kh, kw):
        return 0.1 * jax.random.normal(k, (cout, cin, kh, kw), jnp.float32)

    w1 = conv_w(ks[0], c1, 3, 3, 3)
    w2 = conv_w(ks[1], c2, c1, 3, 3)
    w3 = conv_w(ks[2], E, c2, 1, 1)
    b3 = 0.1 * jax.random.normal(ks[3], (E,), jnp.float32)

    def bn_fold(k, c):
        kg, kb, km, kv = jax.random.split(k, 4)
        gamma = 1.0 + 0.1 * jax.random.normal(kg, (c,), jnp.float32)
        beta = 0.1 * jax.random.normal(kb, (c,), jnp.float32)
        mean = 0.1 * jax.random.normal(km, (c,), jnp.float32)
        var = jax.random.uniform(kv, (c,), jnp.float32, 0.5, 1.5)
        scale = gamma * jax.lax.rsqrt(var + eps)
        shift = beta - mean * scale
        return scale, shift

    scale1, shift1 = bn_fold(ks[4], c1)
    scale2, shift2 = bn_fold(ks[5], c2)

    # --- kernel-layout parameters (padded channels are zero-filled) ----------
    c1p, c2p, Ep = _round_up(c1, 128), _round_up(c2, 128), _round_up(E, 128)

    def padvec(v, n):
        return jnp.pad(v, (0, n - v.shape[0])).reshape(1, n).astype(jnp.float32)

    # Stage-1: tap-major im2col weight, K = 9*3 = 27 padded to 32.
    w1_blocks = [w1[:, :, kh, kw].T for kh in range(3) for kw in range(3)]
    w1k = jnp.concatenate(w1_blocks, axis=0)                        # (27, c1)
    w1k = jnp.pad(w1k, ((0, 32 - 27), (0, c1p - c1))).astype(jnp.bfloat16)

    # Stage-2: taps grouped by flat row offset, K blocks stacked in the phase
    # order [ph(1,0), ph(0,0), ph(0,1), ph(1,1)] (must match _stage23).
    def tap(kh, kw):
        t = w2[:, :, kh, kw].T                                      # (c1, c2)
        return jnp.pad(t, ((0, c1p - c1), (0, c2p - c2)))

    w2g0 = jnp.concatenate([tap(1, 0), tap(0, 0), tap(0, 1), tap(1, 1)],
                           axis=0).astype(jnp.bfloat16)             # (4*c1p, c2p)
    w2g1 = jnp.concatenate([tap(1, 2), tap(0, 2)], axis=0).astype(jnp.bfloat16)
    w2g2 = jnp.concatenate([tap(2, 0), tap(2, 1)], axis=0).astype(jnp.bfloat16)
    w2g3 = tap(2, 2).astype(jnp.bfloat16)                           # (c1p, c2p)

    # Stage-3 1x1 projection.
    wpk = jnp.pad(w3[:, :, 0, 0].T,
                  ((0, c2p - c2), (0, Ep - E))).astype(jnp.bfloat16)
    bpk = jnp.pad(b3, (0, Ep - E)).reshape(1, Ep).astype(jnp.float32)

    return {
        "w1k": w1k, "scale1": padvec(scale1, c1p), "shift1": padvec(shift1, c1p),
        "w2g0": w2g0, "w2g1": w2g1, "w2g2": w2g2, "w2g3": w2g3,
        "scale2": padvec(scale2, c2p), "shift2": padvec(shift2, c2p),
        "wpk": wpk, "bpk": bpk,
        # raw (PyTorch-layout) params for the pure-JAX reference
        "ref_w1": w1, "ref_scale1": scale1, "ref_shift1": shift1,
        "ref_w2": w2, "ref_scale2": scale2, "ref_shift2": shift2,
        "ref_w3": w3, "ref_b3": b3,
    }


if __name__ == "__main__":
    # Small shapes consistent with the module: img_size=16, patch_size=4,
    # in_chans=3 (fixed by the module), embed_dim=32 -> output (B, 16, 32).
    B, C, H, W = 2, 3, 16, 16
    embed_dim = 32

    key = jax.random.PRNGKey(0)
    kx, kp = jax.random.split(key)
    x = jax.random.normal(kx, (B, C, H, W), jnp.float32)
    params = make_params(kp, embed_dim)

    fwd = jax.jit(functools.partial(conv_stem_forward, embed_dim=embed_dim))
    out = jax.block_until_ready(fwd(x, params))

    num_patches = (H // 4) * (W // 4)
    assert out.shape == (B, num_patches, embed_dim), out.shape
    assert bool(jnp.all(jnp.isfinite(out)))

    ref = conv_stem_reference(x, params, embed_dim)
    max_err = float(jnp.max(jnp.abs(out - ref)))
    assert bool(jnp.allclose(out, ref, atol=7.5e-2, rtol=7.5e-2)), max_err

    print("KERNEL_OK")
</pallas_src>

<mosaic_0001>
module attributes {stable_mosaic.version = 11 : i64} {
  func.func @_stage1_kernel(%arg0: i32, %arg1: i32, %arg2: memref<1x64x32xbf16, #tpu.memory_space<vmem>>, %arg3: memref<32x128xbf16, #tpu.memory_space<vmem>>, %arg4: memref<1x128xf32, #tpu.memory_space<vmem>>, %arg5: memref<1x128xf32, #tpu.memory_space<vmem>>, %arg6: memref<1x64x128xbf16, #tpu.memory_space<vmem>>) attributes {dimension_semantics = [#tpu.dimension_semantics<parallel>, #tpu.dimension_semantics<parallel>], iteration_bounds = array<i64: 2, 1>, scalar_prefetch = 0 : i64, scratch_operands = 0 : i64, tpu.core_type = #tpu.core_type<tc>, window_params = [{transform_indices = @transform_0, window_bounds = array<i64: 1, 64, 32>}, {pipeline_mode = #tpu.pipeline_mode<synchronous>, transform_indices = @transform_1, window_bounds = array<i64: 32, 128>}, {pipeline_mode = #tpu.pipeline_mode<synchronous>, transform_indices = @transform_2, window_bounds = array<i64: 1, 128>}, {pipeline_mode = #tpu.pipeline_mode<synchronous>, transform_indices = @transform_3, window_bounds = array<i64: 1, 128>}, {transform_indices = @transform_4, window_bounds = array<i64: 1, 64, 128>}]} {
    %c0 = arith.constant 0 : index
    %c0_0 = arith.constant 0 : index
    %c0_1 = arith.constant 0 : index
    %0 = vector.load %arg2[%c0, %c0_0, %c0_1] : memref<1x64x32xbf16, #tpu.memory_space<vmem>>, vector<1x64x32xbf16>
    %1 = vector.shape_cast %0 : vector<1x64x32xbf16> to vector<64x32xbf16>
    %c0_2 = arith.constant 0 : index
    %c0_3 = arith.constant 0 : index
    %2 = vector.load %arg3[%c0_2, %c0_3] : memref<32x128xbf16, #tpu.memory_space<vmem>>, vector<32x128xbf16>
    %cst = arith.constant dense<0.000000e+00> : vector<64x128xf32>
    %3 = tpu.matmul %1, %2, %cst {dimension_numbers = #tpu.dot_dimension_numbers<[1], [0], [0], [1], [0, 0, 1, 1], [], []>} : vector<64x32xbf16>, vector<32x128xbf16>, vector<64x128xf32> -> vector<64x128xf32>
    %c0_4 = arith.constant 0 : index
    %c0_5 = arith.constant 0 : index
    %4 = vector.load %arg4[%c0_4, %c0_5] : memref<1x128xf32, #tpu.memory_space<vmem>>, vector<1x128xf32>
    %5 = vector.broadcast %4 : vector<1x128xf32> to vector<64x128xf32>
    %6 = arith.mulf %3, %5 : vector<64x128xf32>
    %c0_6 = arith.constant 0 : index
    %c0_7 = arith.constant 0 : index
    %7 = vector.load %arg5[%c0_6, %c0_7] : memref<1x128xf32, #tpu.memory_space<vmem>>, vector<1x128xf32>
    %8 = vector.broadcast %7 : vector<1x128xf32> to vector<64x128xf32>
    %9 = arith.addf %6, %8 : vector<64x128xf32>
    %cst_8 = arith.constant 0.000000e+00 : f32
    %10 = vector.broadcast %cst_8 : f32 to vector<64x128xf32>
    %11 = arith.maximumf %9, %10 : vector<64x128xf32>
    %12 = arith.truncf %11 : vector<64x128xf32> to vector<64x128xbf16>
    %c0_9 = arith.constant 0 : index
    %c0_10 = arith.constant 0 : index
    %c0_11 = arith.constant 0 : index
    %13 = vector.load %arg6[%c0_9, %c0_10, %c0_11] : memref<1x64x128xbf16, #tpu.memory_space<vmem>>, vector<1x64x128xbf16>
    %14 = vector.shape_cast %13 : vector<1x64x128xbf16> to vector<64x128xbf16>
    %15 = vector.shape_cast %12 : vector<64x128xbf16> to vector<1x64x128xbf16>
    tpu.vector_store %arg6[%c0_9, %c0_10, %c0_11], %15 {strides = array<i32>} : memref<1x64x128xbf16, #tpu.memory_space<vmem>>, vector<1x64x128xbf16>,
    return
  }
  func.func @transform_0(%arg0: i32, %arg1: i32) -> (i32, i32, i32) {
    %c0_i32 = arith.constant 0 : i32
    %c0_i32_0 = arith.constant 0 : i32
    return %arg0, %arg1, %c0_i32 : i32, i32, i32
  }
  func.func @transform_1(%arg0: i32, %arg1: i32) -> (i32, i32) {
    %c0_i32 = arith.constant 0 : i32
    %c0_i32_0 = arith.constant 0 : i32
    %c0_i32_1 = arith.constant 0 : i32
    return %c0_i32, %c0_i32_0 : i32, i32
  }
  func.func @transform_2(%arg0: i32, %arg1: i32) -> (i32, i32) {
    %c0_i32 = arith.constant 0 : i32
    %c0_i32_0 = arith.constant 0 : i32
    %c0_i32_1 = arith.constant 0 : i32
    return %c0_i32, %c0_i32_0 : i32, i32
  }
  func.func @transform_3(%arg0: i32, %arg1: i32) -> (i32, i32) {
    %c0_i32 = arith.constant 0 : i32
    %c0_i32_0 = arith.constant 0 : i32
    %c0_i32_1 = arith.constant 0 : i32
    return %c0_i32, %c0_i32_0 : i32, i32
  }
  func.func @transform_4(%arg0: i32, %arg1: i32) -> (i32, i32, i32) {
    %c0_i32 = arith.constant 0 : i32
    %c0_i32_0 = arith.constant 0 : i32
    return %arg0, %arg1, %c0_i32 : i32, i32, i32
  }
}

module attributes {stable_mosaic.version = 11 : i64} {
  func.func @_stage23_kernel(%arg0: i32, %arg1: i32, %arg2: memref<1x32x512xbf16, #tpu.memory_space<vmem>>, %arg3: memref<1x16x512xbf16, #tpu.memory_space<vmem>>, %arg4: memref<512x128xbf16, #tpu.memory_space<vmem>>, %arg5: memref<256x128xbf16, #tpu.memory_space<vmem>>, %arg6: memref<256x128xbf16, #tpu.memory_space<vmem>>, %arg7: memref<128x128xbf16, #tpu.memory_space<vmem>>, %arg8: memref<1x128xf32, #tpu.memory_space<vmem>>, %arg9: memref<1x128xf32, #tpu.memory_space<vmem>>, %arg10: memref<128x128xbf16, #tpu.memory_space<vmem>>, %arg11: memref<1x128xf32, #tpu.memory_space<vmem>>, %arg12: memref<1x32x128xf32, #tpu.memory_space<vmem>>, %arg13: memref<48x512xbf16, #tpu.memory_space<vmem>>) attributes {dimension_semantics = [#tpu.dimension_semantics<parallel>, #tpu.dimension_semantics<parallel>], iteration_bounds = array<i64: 2, 1>, scalar_prefetch = 0 : i64, scratch_operands = 1 : i64, tpu.core_type = #tpu.core_type<tc>, window_params = [{transform_indices = @transform_0, window_bounds = array<i64: 1, 32, 512>}, {transform_indices = @transform_1, window_bounds = array<i64: 1, 16, 512>}, {pipeline_mode = #tpu.pipeline_mode<synchronous>, transform_indices = @transform_2, window_bounds = array<i64: 512, 128>}, {pipeline_mode = #tpu.pipeline_mode<synchronous>, transform_indices = @transform_3, window_bounds = array<i64: 256, 128>}, {pipeline_mode = #tpu.pipeline_mode<synchronous>, transform_indices = @transform_4, window_bounds = array<i64: 256, 128>}, {pipeline_mode = #tpu.pipeline_mode<synchronous>, transform_indices = @transform_5, window_bounds = array<i64: 128, 128>}, {pipeline_mode = #tpu.pipeline_mode<synchronous>, transform_indices = @transform_6, window_bounds = array<i64: 1, 128>}, {pipeline_mode = #tpu.pipeline_mode<synchronous>, transform_indices = @transform_7, window_bounds = array<i64: 1, 128>}, {pipeline_mode = #tpu.pipeline_mode<synchronous>, transform_indices = @transform_8, window_bounds = array<i64: 128, 128>}, {pipeline_mode = #tpu.pipeline_mode<synchronous>, transform_indices = @transform_9, window_bounds = array<i64: 1, 128>}, {transform_indices = @transform_10, window_bounds = array<i64: 1, 32, 128>}]} {
    %c0 = arith.constant 0 : index
    %c0_0 = arith.constant 0 : index
    %c0_1 = arith.constant 0 : index
    %0 = vector.load %arg2[%c0, %c0_0, %c0_1] : memref<1x32x512xbf16, #tpu.memory_space<vmem>>, vector<1x32x512xbf16>
    %1 = vector.shape_cast %0 : vector<1x32x512xbf16> to vector<32x512xbf16>
    %c0_2 = arith.constant 0 : index
    %c0_3 = arith.constant 0 : index
    %2 = vector.load %arg13[%c0_2, %c0_3] : memref<48x512xbf16, #tpu.memory_space<vmem>>, vector<32x512xbf16>
    tpu.vector_store %arg13[%c0_2, %c0_3], %1 {strides = array<i32>} : memref<48x512xbf16, #tpu.memory_space<vmem>>, vector<32x512xbf16>,
    %c0_4 = arith.constant 0 : index
    %c0_5 = arith.constant 0 : index
    %c0_6 = arith.constant 0 : index
    %3 = vector.load %arg3[%c0_4, %c0_5, %c0_6] : memref<1x16x512xbf16, #tpu.memory_space<vmem>>, vector<1x16x512xbf16>
    %4 = vector.shape_cast %3 : vector<1x16x512xbf16> to vector<16x512xbf16>
    %c32 = arith.constant 32 : index
    %c0_7 = arith.constant 0 : index
    %5 = vector.load %arg13[%c32, %c0_7] : memref<48x512xbf16, #tpu.memory_space<vmem>>, vector<16x512xbf16>
    tpu.vector_store %arg13[%c32, %c0_7], %4 {strides = array<i32>} : memref<48x512xbf16, #tpu.memory_space<vmem>>, vector<16x512xbf16>,
    %c0_8 = arith.constant 0 : index
    %c0_9 = arith.constant 0 : index
    %6 = vector.load %arg13[%c0_8, %c0_9] : memref<48x512xbf16, #tpu.memory_space<vmem>>, vector<32x512xbf16>
    %c0_10 = arith.constant 0 : index
    %c0_11 = arith.constant 0 : index
    %7 = vector.load %arg4[%c0_10, %c0_11] : memref<512x128xbf16, #tpu.memory_space<vmem>>, vector<512x128xbf16>
    %cst = arith.constant dense<0.000000e+00> : vector<32x128xf32>
    %8 = tpu.matmul %6, %7, %cst {dimension_numbers = #tpu.dot_dimension_numbers<[1], [0], [0], [1], [0, 0, 1, 1], [], []>} : vector<32x512xbf16>, vector<512x128xbf16>, vector<32x128xf32> -> vector<32x128xf32>
    %c1 = arith.constant 1 : index
    %c0_12 = arith.constant 0 : index
    %9 = vector.load %arg13[%c1, %c0_12] : memref<48x512xbf16, #tpu.memory_space<vmem>>, vector<32x256xbf16>
    %c0_13 = arith.constant 0 : index
    %c0_14 = arith.constant 0 : index
    %10 = vector.load %arg5[%c0_13, %c0_14] : memref<256x128xbf16, #tpu.memory_space<vmem>>, vector<256x128xbf16>
    %cst_15 = arith.constant dense<0.000000e+00> : vector<32x128xf32>
    %11 = tpu.matmul %9, %10, %cst_15 {dimension_numbers = #tpu.dot_dimension_numbers<[1], [0], [0], [1], [0, 0, 1, 1], [], []>} : vector<32x256xbf16>, vector<256x128xbf16>, vector<32x128xf32> -> vector<32x128xf32>
    %12 = arith.addf %8, %11 : vector<32x128xf32>
    %c5 = arith.constant 5 : index
    %c128 = arith.constant 128 : index
    %13 = vector.load %arg13[%c5, %c128] : memref<48x512xbf16, #tpu.memory_space<vmem>>, vector<32x256xbf16>
    %c0_16 = arith.constant 0 : index
    %c0_17 = arith.constant 0 : index
    %14 = vector.load %arg6[%c0_16, %c0_17] : memref<256x128xbf16, #tpu.memory_space<vmem>>, vector<256x128xbf16>
    %cst_18 = arith.constant dense<0.000000e+00> : vector<32x128xf32>
    %15 = tpu.matmul %13, %14, %cst_18 {dimension_numbers = #tpu.dot_dimension_numbers<[1], [0], [0], [1], [0, 0, 1, 1], [], []>} : vector<32x256xbf16>, vector<256x128xbf16>, vector<32x128xf32> -> vector<32x128xf32>
    %16 = arith.addf %12, %15 : vector<32x128xf32>
    %c6 = arith.constant 6 : index
    %c128_19 = arith.constant 128 : index
    %17 = vector.load %arg13[%c6, %c128_19] : memref<48x512xbf16, #tpu.memory_space<vmem>>, vector<32x128xbf16>
    %c0_20 = arith.constant 0 : index
    %c0_21 = arith.constant 0 : index
    %18 = vector.load %arg7[%c0_20, %c0_21] : memref<128x128xbf16, #tpu.memory_space<vmem>>, vector<128x128xbf16>
    %cst_22 = arith.constant dense<0.000000e+00> : vector<32x128xf32>
    %19 = tpu.matmul %17, %18, %cst_22 {dimension_numbers = #tpu.dot_dimension_numbers<[1], [0], [0], [1], [0, 0, 1, 1], [], []>} : vector<32x128xbf16>, vector<128x128xbf16>, vector<32x128xf32> -> vector<32x128xf32>
    %20 = arith.addf %16, %19 : vector<32x128xf32>
    %c0_23 = arith.constant 0 : index
    %c0_24 = arith.constant 0 : index
    %21 = vector.load %arg8[%c0_23, %c0_24] : memref<1x128xf32, #tpu.memory_space<vmem>>, vector<1x128xf32>
    %22 = vector.broadcast %21 : vector<1x128xf32> to vector<32x128xf32>
    %23 = arith.mulf %20, %22 : vector<32x128xf32>
    %c0_25 = arith.constant 0 : index
    %c0_26 = arith.constant 0 : index
    %24 = vector.load %arg9[%c0_25, %c0_26] : memref<1x128xf32, #tpu.memory_space<vmem>>, vector<1x128xf32>
    %25 = vector.broadcast %24 : vector<1x128xf32> to vector<32x128xf32>
    %26 = arith.addf %23, %25 : vector<32x128xf32>
    %cst_27 = arith.constant 0.000000e+00 : f32
    %27 = vector.broadcast %cst_27 : f32 to vector<32x128xf32>
    %28 = arith.maximumf %26, %27 : vector<32x128xf32>
    %29 = arith.truncf %28 : vector<32x128xf32> to vector<32x128xbf16>
    %c0_28 = arith.constant 0 : index
    %c0_29 = arith.constant 0 : index
    %30 = vector.load %arg10[%c0_28, %c0_29] : memref<128x128xbf16, #tpu.memory_space<vmem>>, vector<128x128xbf16>
    %cst_30 = arith.constant dense<0.000000e+00> : vector<32x128xf32>
    %31 = tpu.matmul %29, %30, %cst_30 {dimension_numbers = #tpu.dot_dimension_numbers<[1], [0], [0], [1], [0, 0, 1, 1], [], []>} : vector<32x128xbf16>, vector<128x128xbf16>, vector<32x128xf32> -> vector<32x128xf32>
    %c0_31 = arith.constant 0 : index
    %c0_32 = arith.constant 0 : index
    %32 = vector.load %arg11[%c0_31, %c0_32] : memref<1x128xf32, #tpu.memory_space<vmem>>, vector<1x128xf32>
    %33 = vector.broadcast %32 : vector<1x128xf32> to vector<32x128xf32>
    %34 = arith.addf %31, %33 : vector<32x128xf32>
    %c0_33 = arith.constant 0 : index
    %c0_34 = arith.constant 0 : index
    %c0_35 = arith.constant 0 : index
    %35 = vector.load %arg12[%c0_33, %c0_34, %c0_35] : memref<1x32x128xf32, #tpu.memory_space<vmem>>, vector<1x32x128xf32>
    %36 = vector.shape_cast %35 : vector<1x32x128xf32> to vector<32x128xf32>
    %37 = vector.shape_cast %34 : vector<32x128xf32> to vector<1x32x128xf32>
    tpu.vector_store %arg12[%c0_33, %c0_34, %c0_35], %37 {strides = array<i32>} : memref<1x32x128xf32, #tpu.memory_space<vmem>>, vector<1x32x128xf32>,
    return
  }
  func.func @transform_0(%arg0: i32, %arg1: i32) -> (i32, i32, i32) {
    %c0_i32 = arith.constant 0 : i32
    %c0_i32_0 = arith.constant 0 : i32
    return %arg0, %arg1, %c0_i32 : i32, i32, i32
  }
  func.func @transform_1(%arg0: i32, %arg1: i32) -> (i32, i32, i32) {
    %c1_i32 = arith.constant 1 : i32
    %0 = arith.addi %arg1, %c1_i32 : i32
    %c2_i32 = arith.constant 2 : i32
    %1 = arith.muli %0, %c2_i32 : i32
    %c0_i32 = arith.constant 0 : i32
    %c0_i32_0 = arith.constant 0 : i32
    return %arg0, %1, %c0_i32 : i32, i32, i32
  }
  func.func @transform_2(%arg0: i32, %arg1: i32) -> (i32, i32) {
    %c0_i32 = arith.constant 0 : i32
    %c0_i32_0 = arith.constant 0 : i32
    %c0_i32_1 = arith.constant 0 : i32
    return %c0_i32, %c0_i32_0 : i32, i32
  }
  func.func @transform_3(%arg0: i32, %arg1: i32) -> (i32, i32) {
    %c0_i32 = arith.constant 0 : i32
    %c0_i32_0 = arith.constant 0 : i32
    %c0_i32_1 = arith.constant 0 : i32
    return %c0_i32, %c0_i32_0 : i32, i32
  }
  func.func @transform_4(%arg0: i32, %arg1: i32) -> (i32, i32) {
    %c0_i32 = arith.constant 0 : i32
    %c0_i32_0 = arith.constant 0 : i32
    %c0_i32_1 = arith.constant 0 : i32
    return %c0_i32, %c0_i32_0 : i32, i32
  }
  func.func @transform_5(%arg0: i32, %arg1: i32) -> (i32, i32) {
    %c0_i32 = arith.constant 0 : i32
    %c0_i32_0 = arith.constant 0 : i32
    %c0_i32_1 = arith.constant 0 : i32
    return %c0_i32, %c0_i32_0 : i32, i32
  }
  func.func @transform_6(%arg0: i32, %arg1: i32) -> (i32, i32) {
    %c0_i32 = arith.constant 0 : i32
    %c0_i32_0 = arith.constant 0 : i32
    %c0_i32_1 = arith.constant 0 : i32
    return %c0_i32, %c0_i32_0 : i32, i32
  }
  func.func @transform_7(%arg0: i32, %arg1: i32) -> (i32, i32) {
    %c0_i32 = arith.constant 0 : i32
    %c0_i32_0 = arith.constant 0 : i32
    %c0_i32_1 = arith.constant 0 : i32
    return %c0_i32, %c0_i32_0 : i32, i32
  }
  func.func @transform_8(%arg0: i32, %arg1: i32) -> (i32, i32) {
    %c0_i32 = arith.constant 0 : i32
    %c0_i32_0 = arith.constant 0 : i32
    %c0_i32_1 = arith.constant 0 : i32
    return %c0_i32, %c0_i32_0 : i32, i32
  }
  func.func @transform_9(%arg0: i32, %arg1: i32) -> (i32, i32) {
    %c0_i32 = arith.constant 0 : i32
    %c0_i32_0 = arith.constant 0 : i32
    %c0_i32_1 = arith.constant 0 : i32
    return %c0_i32, %c0_i32_0 : i32, i32
  }
  func.func @transform_10(%arg0: i32, %arg1: i32) -> (i32, i32, i32) {
    %c0_i32 = arith.constant 0 : i32
    %c0_i32_0 = arith.constant 0 : i32
    return %arg0, %arg1, %c0_i32 : i32, i32, i32
  }
}

</mosaic_0001>

<llo_original>
// kernel: conv_stem_forward.2
$region0: #{conv_stem_forward.2}
  #allocation0 [shape = 'u32[]', space=smem, size = 0x4, offset = 0x4, fixed_abs, tag = 'smem constant byte address 0x4 - core index']
  #allocation1 [shape = 'u32[144,128]{1,0:T(1,128)}', space=vmem, size = 0x12000, scoped, tag = 'internal scratch']
  %s0 = inlined_call_operand.vmem [shape: bf16[2,64,32], index: 0, kind: input, shape index: {}]
  %s1 = inlined_call_operand.vmem [shape: bf16[32,128], index: 1, kind: input, shape index: {}]
  %s2 = inlined_call_operand.vmem [shape: f32[1,128], index: 2, kind: input, shape index: {}]
  %s3 = inlined_call_operand.vmem [shape: f32[1,128], index: 3, kind: input, shape index: {}]
  %s4 = inlined_call_operand.vmem [shape: bf16[2,64,128], index: 4, kind: output, shape index: {}]
  %s5 = sld [smem:[#allocation0]]
  $region49: #{conv_stem_forward.2} parent=0
    _
  %s7 = ssub.s32 1, %s5
  %s8 = scalar_select 0, %s7, %s5
  loop: start=0, step=1, limit=4
  $region2: #{conv_stem_forward.2} parent=0 // loop_pre_header
    _
  $region3: #{conv_stem_forward.2} parent=0 // loop_header
    %s10 = sphi 0, %s14
    %p11 = scmp.ge.s32.totalorder %s10, 4
    %s17 = sphi 0, %s29
    %s18 = sphi 0, %s25
    %s19 = sphi 0, %s17
    %s20 = sphi 0, %s18
    %s21 = sphi 0, %s19
    %s22 = sphi 0, %s20
    %s34 = sphi 0, %s36
    %s37 = sphi 0, %s34
    %s38 = sphi 0, %s37
    %s54 = sphi 0, %s38
    %s58 = sphi 0, %s58
    %s60 = sphi 0, %s58
    %s61 = sphi 0, %s60
    %s75 = sphi 0, %s61
    %s79 = sphi 0, %s79
    %s81 = sphi 0, %s79
    %s82 = sphi 0, %s81
    %s96 = sphi 0, %s82
    %s100 = sphi 0, %s100
    %s102 = sphi 0, %s100
    %s103 = sphi 0, %s102
    %s117 = sphi 0, %s103
    %s125 = sphi 0, %s127
    %s128 = sphi 0, %s125
    %s129 = sphi 0, %s128
    %s145 = sphi 0, %s129
  $region4: #{conv_stem_forward.2} parent=0 // loop_header_branch
    %13 = sbr.rel (%p11) target = $region8
  $region5: #{conv_stem_forward.2} parent=0 // loop_body
    %s15 = ssub.s32 %s10, 1
    %s16 = ssub.s32 %s10, 2
    %s23 = sadd.s32 1, %s18
    %p24 = scmp.ge.s32.totalorder %s23, 1
    %s25 = scalar_select %p24, 0, %s23
    %s26 = sadd.s32 1, %s17
    %s27 = scalar_select %p24, %s26, %s17
    %p28 = scmp.ge.s32.totalorder %s27, 2
    %s29 = scalar_select %p28, 0, %s27
    %s30 = ssub.s32 %s17, %s29
    %s31 = ssub.s32 %s18, %s25
    %s32 = sor.u32 %s30, %s31
    %p33 = scmp.eq.s32.totalorder %s32, 0
    %s35 = sadd.s32 %s34, 1
    %s36 = scalar_select %p33, %s34, %s35
    %p39 = pneg %p33
    %p40 = scmp.eq.s32.totalorder %s10, 1
    %p41 = por %p39, %p40
    %p42 = scmp.ne.s32.totalorder %s34, %s37
    %p43 = scmp.eq.s32.totalorder %s10, 0
    %p44 = por %p42, %p43
    %p45 = scmp.ne.s32.totalorder %s34, %s37
    %p46 = scmp.eq.s32.totalorder %s15, 1
    %p47 = por %p45, %p46
    %p48 = scmp.ne.s32.totalorder %s37, %s38
    %p49 = scmp.eq.s32.totalorder %s15, 0
    %p50 = por %p48, %p49
    %p51 = scmp.ne.s32.totalorder %s37, %s38
    %p52 = scmp.eq.s32.totalorder %s16, 1
    %p53 = por %p51, %p52
    %p55 = scmp.ne.s32.totalorder %s38, %s54
    %p56 = scmp.eq.s32.totalorder %s16, 0
    %p57 = por %p55, %p56
    %s59 = sadd.s32 %s58, 1
    %p62 = scmp.eq.s32.totalorder %s10, 1
    %p63 = scmp.ne.s32.totalorder %s58, %s60
    %p64 = scmp.eq.s32.totalorder %s10, 0
    %p65 = por %p63, %p64
    %p66 = scmp.ne.s32.totalorder %s58, %s60
    %p67 = scmp.eq.s32.totalorder %s15, 1
    %p68 = por %p66, %p67
    %p69 = scmp.ne.s32.totalorder %s60, %s61
    %p70 = scmp.eq.s32.totalorder %s15, 0
    %p71 = por %p69, %p70
    %p72 = scmp.ne.s32.totalorder %s60, %s61
    %p73 = scmp.eq.s32.totalorder %s16, 1
    %p74 = por %p72, %p73
    %p76 = scmp.ne.s32.totalorder %s61, %s75
    %p77 = scmp.eq.s32.totalorder %s16, 0
    %p78 = por %p76, %p77
    %s80 = sadd.s32 %s79, 1
    %p83 = scmp.eq.s32.totalorder %s10, 1
    %p84 = scmp.ne.s32.totalorder %s79, %s81
    %p85 = scmp.eq.s32.totalorder %s10, 0
    %p86 = por %p84, %p85
    %p87 = scmp.ne.s32.totalorder %s79, %s81
    %p88 = scmp.eq.s32.totalorder %s15, 1
    %p89 = por %p87, %p88
    %p90 = scmp.ne.s32.totalorder %s81, %s82
    %p91 = scmp.eq.s32.totalorder %s15, 0
    %p92 = por %p90, %p91
    %p93 = scmp.ne.s32.totalorder %s81, %s82
    %p94 = scmp.eq.s32.totalorder %s16, 1
    %p95 = por %p93, %p94
    %p97 = scmp.ne.s32.totalorder %s82, %s96
    %p98 = scmp.eq.s32.totalorder %s16, 0
    %p99 = por %p97, %p98
    %s101 = sadd.s32 %s100, 1
    %p104 = scmp.eq.s32.totalorder %s10, 1
    %p105 = scmp.ne.s32.totalorder %s100, %s102
    %p106 = scmp.eq.s32.totalorder %s10, 0
    %p107 = por %p105, %p106
    %p108 = scmp.ne.s32.totalorder %s100, %s102
    %p109 = scmp.eq.s32.totalorder %s15, 1
    %p110 = por %p108, %p109
    %p111 = scmp.ne.s32.totalorder %s102, %s103
    %p112 = scmp.eq.s32.totalorder %s15, 0
    %p113 = por %p111, %p112
    %p114 = scmp.ne.s32.totalorder %s102, %s103
    %p115 = scmp.eq.s32.totalorder %s16, 1
    %p116 = por %p114, %p115
    %p118 = scmp.ne.s32.totalorder %s103, %s117
    %p119 = scmp.eq.s32.totalorder %s16, 0
    %p120 = por %p118, %p119
    %s121 = ssub.s32 %s17, %s29
    %s122 = ssub.s32 %s18, %s25
    %s123 = sor.u32 %s121, %s122
    %p124 = scmp.eq.s32.totalorder %s123, 0
    %s126 = sadd.s32 %s125, 1
    %s127 = scalar_select %p124, %s125, %s126
    %p130 = pneg %p124
    %p131 = scmp.eq.s32.totalorder %s10, 1
    %p132 = por %p130, %p131
    %p133 = scmp.ne.s32.totalorder %s125, %s128
    %p134 = scmp.eq.s32.totalorder %s10, 0
    %p135 = por %p133, %p134
    %p136 = scmp.ne.s32.totalorder %s125, %s128
    %p137 = scmp.eq.s32.totalorder %s15, 1
    %p138 = por %p136, %p137
    %p139 = scmp.ne.s32.totalorder %s128, %s129
    %p140 = scmp.eq.s32.totalorder %s15, 0
    %p141 = por %p139, %p140
    %p142 = scmp.ne.s32.totalorder %s128, %s129
    %p143 = scmp.eq.s32.totalorder %s16, 1
    %p144 = por %p142, %p143
    %p146 = scmp.ne.s32.totalorder %s129, %s145
    %p147 = scmp.eq.s32.totalorder %s16, 0
    %p148 = por %p146, %p147
    %p149 = scmp.le.s32.totalorder 1, %s10
    %p150 = scmp.lt.s32.totalorder %s10, 3
    %p151 = pnand %p149, %p150
    %p152 = pneg %p151
    // Predicated region
    $region9: #{conv_stem_forward.2} parent=5 // pred_check
      _
    $region10: #{conv_stem_forward.2} parent=5 // pred_check_branch
      %154 = sbr.rel (%p151) target = $region12
    $region11: #{conv_stem_forward.2} parent=5 // pred_region
      %s155 = ssub.s32 %s10, 1
      // Predicated region
      $region13: #{conv_stem_forward.2} parent=11 // pred_check
        %p156 = pneg %p71
      $region14: #{conv_stem_forward.2} parent=11 // pred_check_branch
        %158 = sbr.rel (%p156) target = $region16
      $region15: #{conv_stem_forward.2} parent=11 // pred_region
        _
      $region16: #{conv_stem_forward.2} parent=11 // pred_fallthru
        _
      // Predicated region
      $region17: #{conv_stem_forward.2} parent=11 // pred_check
        %p159 = pneg %p92
      $region18: #{conv_stem_forward.2} parent=11 // pred_check_branch
        %161 = sbr.rel (%p159) target = $region20
      $region19: #{conv_stem_forward.2} parent=11 // pred_region
        _
      $region20: #{conv_stem_forward.2} parent=11 // pred_fallthru
        _
      // Predicated region
      $region21: #{conv_stem_forward.2} parent=11 // pred_check
        %p162 = pneg %p113
      $region22: #{conv_stem_forward.2} parent=11 // pred_check_branch
        %164 = sbr.rel (%p162) target = $region24
      $region23: #{conv_stem_forward.2} parent=11 // pred_region
        _
      $region24: #{conv_stem_forward.2} parent=11 // pred_fallthru
        _
    $region12: #{conv_stem_forward.2} parent=5 // pred_fallthru
      _
    %p165 = scmp.lt.s32.totalorder %s10, 2
    // Predicated region
    $region25: #{conv_stem_forward.2} parent=5 // pred_check
      %p166 = pneg %p165
    $region26: #{conv_stem_forward.2} parent=5 // pred_check_branch
      %168 = sbr.rel (%p166) target = $region28
    $region27: #{conv_stem_forward.2} parent=5 // pred_region
      // Predicated region
      $region29: #{conv_stem_forward.2} parent=27 // pred_check
        %p169 = pneg %p44
      $region30: #{conv_stem_forward.2} parent=27 // pred_check_branch
        %171 = sbr.rel (%p169) target = $region32
      $region31: #{conv_stem_forward.2} parent=27 // pred_region
        %s172 = smul.u32 8, %s18
        %p173 = scmp.lt.s32.totalorder %s17, 1
        %s174 = scalar_select %p173, %s17, 1
        %p175 = scmp.lt.s32.totalorder %s172, 7
        %s176 = scalar_select %p175, %s172, 7
        %s177 = smul.addr %s174, 8
        %s178 = sadd.s32 %s176, %s177
        %s179 = smul.addr %s178, 4
        %s180 = scalar_lea.vmem %s0, %s179
        %s181 = smul.u32 8, %s18
      $region32: #{conv_stem_forward.2} parent=27 // pred_fallthru
        _
    $region28: #{conv_stem_forward.2} parent=5 // pred_fallthru
      _
    %p182 = scmp.le.s32.totalorder 1, %s10
    %p183 = scmp.lt.s32.totalorder %s10, 3
    %p184 = pnand %p182, %p183
    %p185 = pneg %p184
    // Predicated region
    $region33: #{conv_stem_forward.2} parent=5 // pred_check
      _
    $region34: #{conv_stem_forward.2} parent=5 // pred_check_branch
      %187 = sbr.rel (%p184) target = $region36
    $region35: #{conv_stem_forward.2} parent=5 // pred_region
      %s188 = ssub.s32 %s10, 1
      %s189 = smul.u32 8, %s20
      %p190 = scmp.lt.s32.totalorder %s19, 1
      %s191 = scalar_select %p190, %s19, 1
      %p192 = scmp.lt.s32.totalorder %s189, 7
      %s193 = scalar_select %p192, %s189, 7
      %s194 = smul.addr %s191, 8
      %s195 = sadd.s32 %s193, %s194
      %s196 = smul.addr %s195, 4
      %s197 = scalar_lea.vmem %s0, %s196
      %p198 = pneg %p50
      %p199 = pneg %p47
      %p200 = pneg %p71
      %p201 = pneg %p68
      %p202 = pneg %p92
      %p203 = pneg %p89
      %p204 = pneg %p113
      %p205 = pneg %p110
      %p206 = pneg %p141
      %p207 = pneg %p138
      %s208 = smul.u32 8, %s20
      %p209 = scmp.lt.s32.totalorder %s19, 1
      %s210 = scalar_select %p209, %s19, 1
      %p211 = scmp.lt.s32.totalorder %s208, 7
      %s212 = scalar_select %p211, %s208, 7
      %s213 = smul.addr %s210, 8
      %s214 = sadd.s32 %s212, %s213
      %s215 = smul.addr %s214, 4
      %s216 = scalar_lea.vmem %s4, %s215
      %s217 = smul.u32 8, %s20
      %p218 = scmp.lt.s32.totalorder %s19, 1
      %s219 = scalar_select %p218, %s19, 1
      %p220 = scmp.lt.s32.totalorder %s217, 7
      %s221 = scalar_select %p220, %s217, 7
      %s222 = smul.addr %s219, 8
      %s223 = sadd.s32 %s221, %s222
      %s224 = smul.addr %s223, 4
      %s225 = scalar_lea.vmem %s0, %s224
      %s226 = smul.u32 8, %s20
      %s227 = smul.u32 8, %s20
      %p228 = scmp.lt.s32.totalorder %s19, 1
      %s229 = scalar_select %p228, %s19, 1
      %p230 = scmp.lt.s32.totalorder %s227, 7
      %s231 = scalar_select %p230, %s227, 7
      %s232 = smul.addr %s229, 8
      %s233 = sadd.s32 %s231, %s232
      %s234 = smul.addr %s233, 4
      %s235 = scalar_lea.vmem %s4, %s234
      %s236 = smul.u32 8, %s20
      %v238 = vld [vmem:[%s225] sm:$0xf]
      %v239 = vld [vmem:[%s225 + $0x4] sm:$0xf]
      %v240 = vld [vmem:[%s225 + $0x8] sm:$0xf]
      %v241 = vld [vmem:[%s225 + $0xc] sm:$0xf]
      %v242 = vld [vmem:[%s225 + $0x10] sm:$0xf]
      %v243 = vld [vmem:[%s225 + $0x14] sm:$0xf]
      %v244 = vld [vmem:[%s225 + $0x18] sm:$0xf]
      %v245 = vld [vmem:[%s225 + $0x1c] sm:$0xf]
      %v246 = vld [vmem:[%s1] sm:$0xf]
      %v247 = vld [vmem:[%s1 + $0x4] sm:$0xf]
      %v248 = vld [vmem:[%s1 + $0x8] sm:$0xf]
      %v249 = vld [vmem:[%s1 + $0xc] sm:$0xf]
      %v258 = vunpack.c.l.b16 %v238
      %v259 = vunpack.c.l.b16 %v239
      %v260 = vunpack.c.l.b16 %v240
      %v261 = vunpack.c.l.b16 %v241
      %v262 = vunpack.c.l.b16 %v242
      %v263 = vunpack.c.l.b16 %v243
      %v264 = vunpack.c.l.b16 %v244
      %v265 = vunpack.c.l.b16 %v245
      %v266 = vpack.c.b16 %v259, %v258
      %v267 = vpack.c.b16 %v261, %v260
      %v268 = vpack.c.b16 %v263, %v262
      %v269 = vpack.c.b16 %v265, %v264
      %v274 = vunpack.c.l.b16 %v246
      %v275 = vunpack.c.l.b16 %v247
      %v276 = vunpack.c.l.b16 %v248
      %v277 = vunpack.c.l.b16 %v249
      %v278 = vpack.c.b16 %v275, %v274
      %v279 = vpack.c.b16 %v277, %v276
      %vm282 = vcmask 261120
      %v284 = vsel %vm282, %v266, 0
      %v287 = vsel %vm282, %v267, 0
      %v290 = vsel %vm282, %v268, 0
      %v293 = vsel %vm282, %v269, 0
      %295 = vmatprep.subr.bf16.mxu0 0
      %296 = vmatpush1.bf16.msra.mxu0 0
      %297 = vmatprep.subr.bf16.mxu0 0
      %298 = vmatpush1.bf16.msra.mxu0 0
      %299 = vmatprep.subr.bf16.mxu0 0
      %300 = vmatpush1.bf16.msra.mxu0 0
      %301 = vmatprep.subr.bf16.mxu0 0
      %302 = vmatpush1.bf16.msra.mxu0 0
      %303 = vmatprep.subr.bf16.mxu0 0
      %304 = vmatpush1.bf16.msra.mxu0 0
      %305 = vmatprep.subr.bf16.mxu0 0
      %306 = vmatpush1.bf16.msra.mxu0 0
      %307 = vmatprep.subr.bf16.mxu0 0
      %308 = vmatpush1.bf16.msra.mxu0 %v279
      %309 = vmatprep.subr.bf16.mxu0 0
      %310 = vmatpush1.bf16.msra.mxu0 %v278
      %311 = vmatprep.subr.bf16.mxu0 0
      %312 = vmatpush2.bf16.msra.mxu0 0
      %313 = vmatprep.subr.bf16.mxu0 0
      %314 = vmatpush2.bf16.msra.mxu0 0
      %315 = vmatprep.subr.bf16.mxu0 0
      %316 = vmatpush2.bf16.msra.mxu0 0
      %317 = vmatprep.subr.bf16.mxu0 0
      %318 = vmatpush2.bf16.msra.mxu0 0
      %319 = vmatprep.subr.bf16.mxu0 0
      %320 = vmatpush2.bf16.msra.mxu0 0
      %321 = vmatprep.subr.bf16.mxu0 0
      %322 = vmatpush2.bf16.msra.mxu0 0
      %323 = vmatprep.subr.bf16.mxu0 0
      %324 = vmatpush2.bf16.msra.mxu0 0
      %325 = vmatprep.subr.bf16.mxu0 0
      %326 = vmatpush2.bf16.msra.mxu0 0
      %327 = vmatprep.mubr.bf16.mxu0 0
      %328 = vmatmul.mubr.bf16.gmra.mxu0 %v284
      %v329 = vpop.f32.mrf.mxu0
      %v330 = vadd.f32 0.0, %v329
      %v331 = vpop.f32.mrf.mxu0
      %v332 = vpop.f32.mrf.mxu0
      %v333 = vadd.f32 0.0, %v332
      %v334 = vpop.f32.mrf.mxu0
      %335 = vmatprep.mubr.bf16.mxu0 0
      %336 = vmatmul.mubr.bf16.gmra.mxu0 %v287
      %v337 = vpop.f32.mrf.mxu0
      %v338 = vadd.f32 0.0, %v337
      %v339 = vpop.f32.mrf.mxu0
      %v340 = vpop.f32.mrf.mxu0
      %v341 = vadd.f32 0.0, %v340
      %v342 = vpop.f32.mrf.mxu0
      %343 = vmatprep.mubr.bf16.mxu0 0
      %344 = vmatmul.mubr.bf16.gmra.mxu0 %v290
      %v345 = vpop.f32.mrf.mxu0
      %v346 = vadd.f32 0.0, %v345
      %v347 = vpop.f32.mrf.mxu0
      %v348 = vpop.f32.mrf.mxu0
      %v349 = vadd.f32 0.0, %v348
      %v350 = vpop.f32.mrf.mxu0
      %351 = vmatprep.mubr.bf16.mxu0 0
      %352 = vmatmul.mubr.bf16.gmra.mxu0 %v293
      %v353 = vpop.f32.mrf.mxu0
      %v354 = vadd.f32 0.0, %v353
      %v355 = vpop.f32.mrf.mxu0
      %v356 = vpop.f32.mrf.mxu0
      %v357 = vadd.f32 0.0, %v356
      %v358 = vpop.f32.mrf.mxu0
      %359 = vdwg.mxu0
      %v360 = vld [vmem:[%s2] sm:$0x1]
      %v362 = vlaneseq
      %v363 = vshrl.u32 %v362, 7
      %v364 = vsub.s32 0, %v363
      %v365 = vrot.slane %v360, %v364
      %v367 = vmul.f32 %v330, %v365
      %v368 = vmul.f32 %v333, %v365
      %v369 = vmul.f32 %v338, %v365
      %v370 = vmul.f32 %v341, %v365
      %v371 = vmul.f32 %v346, %v365
      %v372 = vmul.f32 %v349, %v365
      %v373 = vmul.f32 %v354, %v365
      %v374 = vmul.f32 %v357, %v365
      %v375 = vld [vmem:[%s3] sm:$0x1]
      %v377 = vlaneseq
      %v378 = vshrl.u32 %v377, 7
      %v379 = vsub.s32 0, %v378
      %v380 = vrot.slane %v375, %v379
      %v382 = vadd.f32 %v367, %v380
      %v383 = vadd.f32 %v368, %v380
      %v384 = vadd.f32 %v369, %v380
      %v385 = vadd.f32 %v370, %v380
      %v386 = vadd.f32 %v371, %v380
      %v387 = vadd.f32 %v372, %v380
      %v388 = vadd.f32 %v373, %v380
      %v389 = vadd.f32 %v374, %v380
      %v390 = vmax.f32 %v382, 0.0
      %v391 = vmax.f32 %v383, 0.0
      %v392 = vmax.f32 %v384, 0.0
      %v393 = vmax.f32 %v385, 0.0
      %v394 = vmax.f32 %v386, 0.0
      %v395 = vmax.f32 %v387, 0.0
      %v396 = vmax.f32 %v388, 0.0
      %v397 = vmax.f32 %v389, 0.0
      %v398 = vpack.c.bf16 %v391, %v390
      %v399 = vpack.c.bf16 %v393, %v392
      %v400 = vpack.c.bf16 %v395, %v394
      %v401 = vpack.c.bf16 %v397, %v396
      %v406 = vunpack.c.l.b16 %v398
      %v407 = vunpack.c.h.b16 %v398
      %v408 = vunpack.c.l.b16 %v399
      %v409 = vunpack.c.h.b16 %v399
      %v410 = vunpack.c.l.b16 %v400
      %v411 = vunpack.c.h.b16 %v400
      %v412 = vunpack.c.l.b16 %v401
      %v413 = vunpack.c.h.b16 %v401
      %v414 = vpack.c.b16 %v406, %v406
      %v415 = vpack.c.b16 %v407, %v407
      %v416 = vpack.c.b16 %v408, %v408
      %v417 = vpack.c.b16 %v409, %v409
      %v418 = vpack.c.b16 %v410, %v410
      %v419 = vpack.c.b16 %v411, %v411
      %v420 = vpack.c.b16 %v412, %v412
      %v421 = vpack.c.b16 %v413, %v413
      %430 = vst [vmem:[%s235] sm:$0xf] %v414
      %431 = vst [vmem:[%s235 + $0x4] sm:$0xf] %v415
      %432 = vst [vmem:[%s235 + $0x8] sm:$0xf] %v416
      %433 = vst [vmem:[%s235 + $0xc] sm:$0xf] %v417
      %434 = vst [vmem:[%s235 + $0x10] sm:$0xf] %v418
      %435 = vst [vmem:[%s235 + $0x14] sm:$0xf] %v419
      %436 = vst [vmem:[%s235 + $0x18] sm:$0xf] %v420
      %437 = vst [vmem:[%s235 + $0x1c] sm:$0xf] %v421
      %s438 = smul.u32 8, %s20
      %p439 = scmp.lt.s32.totalorder %s19, 1
      %s440 = scalar_select %p439, %s19, 1
      %p441 = scmp.lt.s32.totalorder %s438, 7
      %s442 = scalar_select %p441, %s438, 7
      %s443 = smul.addr %s440, 8
      %s444 = sadd.s32 %s442, %s443
      %s445 = smul.addr %s444, 4
      %s446 = scalar_lea.vmem %s4, %s445
      // Predicated region
      $region37: #{conv_stem_forward.2} parent=35 // pred_check
        %p447 = pneg %p138
      $region38: #{conv_stem_forward.2} parent=35 // pred_check_branch
        %449 = sbr.rel (%p447) target = $region40
      $region39: #{conv_stem_forward.2} parent=35 // pred_region
        %s450 = smul.u32 8, %s20
      $region40: #{conv_stem_forward.2} parent=35 // pred_fallthru
        _
    $region36: #{conv_stem_forward.2} parent=5 // pred_fallthru
      _
    %p451 = scmp.le.s32.totalorder 2, %s10
    // Predicated region
    $region41: #{conv_stem_forward.2} parent=5 // pred_check
      %p452 = pneg %p451
    $region42: #{conv_stem_forward.2} parent=5 // pred_check_branch
      %454 = sbr.rel (%p452) target = $region44
    $region43: #{conv_stem_forward.2} parent=5 // pred_region
      %s455 = ssub.s32 %s10, 2
      // Predicated region
      $region45: #{conv_stem_forward.2} parent=43 // pred_check
        %p456 = pneg %p144
      $region46: #{conv_stem_forward.2} parent=43 // pred_check_branch
        %458 = sbr.rel (%p456) target = $region48
      $region47: #{conv_stem_forward.2} parent=43 // pred_region
        %s459 = smul.u32 8, %s22
        %p460 = scmp.lt.s32.totalorder %s21, 1
        %s461 = scalar_select %p460, %s21, 1
        %p462 = scmp.lt.s32.totalorder %s459, 7
        %s463 = scalar_select %p462, %s459, 7
        %s464 = smul.addr %s461, 8
        %s465 = sadd.s32 %s463, %s464
        %s466 = smul.addr %s465, 4
        %s467 = scalar_lea.vmem %s4, %s466
      $region48: #{conv_stem_forward.2} parent=43 // pred_fallthru
        _
    $region44: #{conv_stem_forward.2} parent=5 // pred_fallthru
      _
  $region6: #{conv_stem_forward.2} parent=0 // loop_footer
    %s14 = sadd.s32 1, %s10
  $region7: #{conv_stem_forward.2} parent=0 // loop_footer_branch
    %9 = sbr.rel target = $region3
  $region8: #{conv_stem_forward.2} parent=0 // loop_exit
    _

// kernel: conv_stem_forward.3
$region0: #{conv_stem_forward.3}
  #allocation0 [shape = 'u32[]', space=smem, size = 0x4, offset = 0x4, fixed_abs, tag = 'smem constant byte address 0x4 - core index']
  #allocation1 [shape = 'u32[144,128]{1,0:T(1,128)}', space=vmem, size = 0x12000, scoped, tag = 'internal scratch']
  #allocation2 [shape = 'bf16[48,512]{1,0:T(8,128)(2,1)}', space=vmem, size = 0xc000, scoped, tag = 'scratch operand']
  %s0 = inlined_call_operand.vmem [shape: bf16[2,48,512], index: 0, kind: input, shape index: {}, may-alias: {0,1}]
  %s1 = inlined_call_operand.vmem [shape: bf16[2,48,512], index: 1, kind: input, shape index: {}, may-alias: {0,1}]
  %s2 = inlined_call_operand.vmem [shape: bf16[512,128], index: 2, kind: input, shape index: {}]
  %s3 = inlined_call_operand.vmem [shape: bf16[256,128], index: 3, kind: input, shape index: {}]
  %s4 = inlined_call_operand.vmem [shape: bf16[256,128], index: 4, kind: input, shape index: {}]
  %s5 = inlined_call_operand.vmem [shape: bf16[128,128], index: 5, kind: input, shape index: {}]
  %s6 = inlined_call_operand.vmem [shape: f32[1,128], index: 6, kind: input, shape index: {}]
  %s7 = inlined_call_operand.vmem [shape: f32[1,128], index: 7, kind: input, shape index: {}]
  %s8 = inlined_call_operand.vmem [shape: bf16[128,128], index: 8, kind: input, shape index: {}]
  %s9 = inlined_call_operand.vmem [shape: f32[1,128], index: 9, kind: input, shape index: {}]
  %s10 = inlined_call_operand.vmem [shape: f32[2,32,128], index: 10, kind: output, shape index: {}]
  %s11 = sld [smem:[#allocation0]]
  $region73: #{conv_stem_forward.3} parent=0
    _
  %s13 = ssub.s32 1, %s11
  %s14 = scalar_select 0, %s13, %s11
  loop: start=0, step=1, limit=4
  $region2: #{conv_stem_forward.3} parent=0 // loop_pre_header
    _
  $region3: #{conv_stem_forward.3} parent=0 // loop_header
    %s16 = sphi 0, %s20
    %p17 = scmp.ge.s32.totalorder %s16, 4
    %s23 = sphi 0, %s35
    %s24 = sphi 0, %s31
    %s25 = sphi 0, %s23
    %s26 = sphi 0, %s24
    %s27 = sphi 0, %s25
    %s28 = sphi 0, %s26
    %s40 = sphi 0, %s42
    %s43 = sphi 0, %s40
    %s44 = sphi 0, %s43
    %s60 = sphi 0, %s44
    %s72 = sphi 0, %s74
    %s75 = sphi 0, %s72
    %s76 = sphi 0, %s75
    %s92 = sphi 0, %s76
    %s96 = sphi 0, %s96
    %s98 = sphi 0, %s96
    %s99 = sphi 0, %s98
    %s113 = sphi 0, %s99
    %s117 = sphi 0, %s117
    %s119 = sphi 0, %s117
    %s120 = sphi 0, %s119
    %s134 = sphi 0, %s120
    %s138 = sphi 0, %s138
    %s140 = sphi 0, %s138
    %s141 = sphi 0, %s140
    %s155 = sphi 0, %s141
    %s159 = sphi 0, %s159
    %s161 = sphi 0, %s159
    %s162 = sphi 0, %s161
    %s176 = sphi 0, %s162
    %s180 = sphi 0, %s180
    %s182 = sphi 0, %s180
    %s183 = sphi 0, %s182
    %s197 = sphi 0, %s183
    %s201 = sphi 0, %s201
    %s203 = sphi 0, %s201
    %s204 = sphi 0, %s203
    %s218 = sphi 0, %s204
    %s222 = sphi 0, %s222
    %s224 = sphi 0, %s222
    %s225 = sphi 0, %s224
    %s239 = sphi 0, %s225
    %s243 = sphi 0, %s243
    %s245 = sphi 0, %s243
    %s246 = sphi 0, %s245
    %s260 = sphi 0, %s246
    %s268 = sphi 0, %s270
    %s271 = sphi 0, %s268
    %s272 = sphi 0, %s271
    %s288 = sphi 0, %s272
  $region4: #{conv_stem_forward.3} parent=0 // loop_header_branch
    %19 = sbr.rel (%p17) target = $region8
  $region5: #{conv_stem_forward.3} parent=0 // loop_body
    %s21 = ssub.s32 %s16, 1
    %s22 = ssub.s32 %s16, 2
    %s29 = sadd.s32 1, %s24
    %p30 = scmp.ge.s32.totalorder %s29, 1
    %s31 = scalar_select %p30, 0, %s29
    %s32 = sadd.s32 1, %s23
    %s33 = scalar_select %p30, %s32, %s23
    %p34 = scmp.ge.s32.totalorder %s33, 2
    %s35 = scalar_select %p34, 0, %s33
    %s36 = ssub.s32 %s23, %s35
    %s37 = ssub.s32 %s24, %s31
    %s38 = sor.u32 %s36, %s37
    %p39 = scmp.eq.s32.totalorder %s38, 0
    %s41 = sadd.s32 %s40, 1
    %s42 = scalar_select %p39, %s40, %s41
    %p45 = pneg %p39
    %p46 = scmp.eq.s32.totalorder %s16, 1
    %p47 = por %p45, %p46
    %p48 = scmp.ne.s32.totalorder %s40, %s43
    %p49 = scmp.eq.s32.totalorder %s16, 0
    %p50 = por %p48, %p49
    %p51 = scmp.ne.s32.totalorder %s40, %s43
    %p52 = scmp.eq.s32.totalorder %s21, 1
    %p53 = por %p51, %p52
    %p54 = scmp.ne.s32.totalorder %s43, %s44
    %p55 = scmp.eq.s32.totalorder %s21, 0
    %p56 = por %p54, %p55
    %p57 = scmp.ne.s32.totalorder %s43, %s44
    %p58 = scmp.eq.s32.totalorder %s22, 1
    %p59 = por %p57, %p58
    %p61 = scmp.ne.s32.totalorder %s44, %s60
    %p62 = scmp.eq.s32.totalorder %s22, 0
    %p63 = por %p61, %p62
    %s64 = sadd.s32 %s24, 1
    %s65 = smul.u32 %s64, 2
    %s66 = sadd.s32 %s31, 1
    %s67 = smul.u32 %s66, 2
    %s68 = ssub.s32 %s23, %s35
    %s69 = ssub.s32 %s65, %s67
    %s70 = sor.u32 %s68, %s69
    %p71 = scmp.eq.s32.totalorder %s70, 0
    %s73 = sadd.s32 %s72, 1
    %s74 = scalar_select %p71, %s72, %s73
    %p77 = pneg %p71
    %p78 = scmp.eq.s32.totalorder %s16, 1
    %p79 = por %p77, %p78
    %p80 = scmp.ne.s32.totalorder %s72, %s75
    %p81 = scmp.eq.s32.totalorder %s16, 0
    %p82 = por %p80, %p81
    %p83 = scmp.ne.s32.totalorder %s72, %s75
    %p84 = scmp.eq.s32.totalorder %s21, 1
    %p85 = por %p83, %p84
    %p86 = scmp.ne.s32.totalorder %s75, %s76
    %p87 = scmp.eq.s32.totalorder %s21, 0
    %p88 = por %p86, %p87
    %p89 = scmp.ne.s32.totalorder %s75, %s76
    %p90 = scmp.eq.s32.totalorder %s22, 1
    %p91 = por %p89, %p90
    %p93 = scmp.ne.s32.totalorder %s76, %s92
    %p94 = scmp.eq.s32.totalorder %s22, 0
    %p95 = por %p93, %p94
    %s97 = sadd.s32 %s96, 1
    %p100 = scmp.eq.s32.totalorder %s16, 1
    %p101 = scmp.ne.s32.totalorder %s96, %s98
    %p102 = scmp.eq.s32.totalorder %s16, 0
    %p103 = por %p101, %p102
    %p104 = scmp.ne.s32.totalorder %s96, %s98
    %p105 = scmp.eq.s32.totalorder %s21, 1
    %p106 = por %p104, %p105
    %p107 = scmp.ne.s32.totalorder %s98, %s99
    %p108 = scmp.eq.s32.totalorder %s21, 0
    %p109 = por %p107, %p108
    %p110 = scmp.ne.s32.totalorder %s98, %s99
    %p111 = scmp.eq.s32.totalorder %s22, 1
    %p112 = por %p110, %p111
    %p114 = scmp.ne.s32.totalorder %s99, %s113
    %p115 = scmp.eq.s32.totalorder %s22, 0
    %p116 = por %p114, %p115
    %s118 = sadd.s32 %s117, 1
    %p121 = scmp.eq.s32.totalorder %s16, 1
    %p122 = scmp.ne.s32.totalorder %s117, %s119
    %p123 = scmp.eq.s32.totalorder %s16, 0
    %p124 = por %p122, %p123
    %p125 = scmp.ne.s32.totalorder %s117, %s119
    %p126 = scmp.eq.s32.totalorder %s21, 1
    %p127 = por %p125, %p126
    %p128 = scmp.ne.s32.totalorder %s119, %s120
    %p129 = scmp.eq.s32.totalorder %s21, 0
    %p130 = por %p128, %p129
    %p131 = scmp.ne.s32.totalorder %s119, %s120
    %p132 = scmp.eq.s32.totalorder %s22, 1
    %p133 = por %p131, %p132
    %p135 = scmp.ne.s32.totalorder %s120, %s134
    %p136 = scmp.eq.s32.totalorder %s22, 0
    %p137 = por %p135, %p136
    %s139 = sadd.s32 %s138, 1
    %p142 = scmp.eq.s32.totalorder %s16, 1
    %p143 = scmp.ne.s32.totalorder %s138, %s140
    %p144 = scmp.eq.s32.totalorder %s16, 0
    %p145 = por %p143, %p144
    %p146 = scmp.ne.s32.totalorder %s138, %s140
    %p147 = scmp.eq.s32.totalorder %s21, 1
    %p148 = por %p146, %p147
    %p149 = scmp.ne.s32.totalorder %s140, %s141
    %p150 = scmp.eq.s32.totalorder %s21, 0
    %p151 = por %p149, %p150
    %p152 = scmp.ne.s32.totalorder %s140, %s141
    %p153 = scmp.eq.s32.totalorder %s22, 1
    %p154 = por %p152, %p153
    %p156 = scmp.ne.s32.totalorder %s141, %s155
    %p157 = scmp.eq.s32.totalorder %s22, 0
    %p158 = por %p156, %p157
    %s160 = sadd.s32 %s159, 1
    %p163 = scmp.eq.s32.totalorder %s16, 1
    %p164 = scmp.ne.s32.totalorder %s159, %s161
    %p165 = scmp.eq.s32.totalorder %s16, 0
    %p166 = por %p164, %p165
    %p167 = scmp.ne.s32.totalorder %s159, %s161
    %p168 = scmp.eq.s32.totalorder %s21, 1
    %p169 = por %p167, %p168
    %p170 = scmp.ne.s32.totalorder %s161, %s162
    %p171 = scmp.eq.s32.totalorder %s21, 0
    %p172 = por %p170, %p171
    %p173 = scmp.ne.s32.totalorder %s161, %s162
    %p174 = scmp.eq.s32.totalorder %s22, 1
    %p175 = por %p173, %p174
    %p177 = scmp.ne.s32.totalorder %s162, %s176
    %p178 = scmp.eq.s32.totalorder %s22, 0
    %p179 = por %p177, %p178
    %s181 = sadd.s32 %s180, 1
    %p184 = scmp.eq.s32.totalorder %s16, 1
    %p185 = scmp.ne.s32.totalorder %s180, %s182
    %p186 = scmp.eq.s32.totalorder %s16, 0
    %p187 = por %p185, %p186
    %p188 = scmp.ne.s32.totalorder %s180, %s182
    %p189 = scmp.eq.s32.totalorder %s21, 1
    %p190 = por %p188, %p189
    %p191 = scmp.ne.s32.totalorder %s182, %s183
    %p192 = scmp.eq.s32.totalorder %s21, 0
    %p193 = por %p191, %p192
    %p194 = scmp.ne.s32.totalorder %s182, %s183
    %p195 = scmp.eq.s32.totalorder %s22, 1
    %p196 = por %p194, %p195
    %p198 = scmp.ne.s32.totalorder %s183, %s197
    %p199 = scmp.eq.s32.totalorder %s22, 0
    %p200 = por %p198, %p199
    %s202 = sadd.s32 %s201, 1
    %p205 = scmp.eq.s32.totalorder %s16, 1
    %p206 = scmp.ne.s32.totalorder %s201, %s203
    %p207 = scmp.eq.s32.totalorder %s16, 0
    %p208 = por %p206, %p207
    %p209 = scmp.ne.s32.totalorder %s201, %s203
    %p210 = scmp.eq.s32.totalorder %s21, 1
    %p211 = por %p209, %p210
    %p212 = scmp.ne.s32.totalorder %s203, %s204
    %p213 = scmp.eq.s32.totalorder %s21, 0
    %p214 = por %p212, %p213
    %p215 = scmp.ne.s32.totalorder %s203, %s204
    %p216 = scmp.eq.s32.totalorder %s22, 1
    %p217 = por %p215, %p216
    %p219 = scmp.ne.s32.totalorder %s204, %s218
    %p220 = scmp.eq.s32.totalorder %s22, 0
    %p221 = por %p219, %p220
    %s223 = sadd.s32 %s222, 1
    %p226 = scmp.eq.s32.totalorder %s16, 1
    %p227 = scmp.ne.s32.totalorder %s222, %s224
    %p228 = scmp.eq.s32.totalorder %s16, 0
    %p229 = por %p227, %p228
    %p230 = scmp.ne.s32.totalorder %s222, %s224
    %p231 = scmp.eq.s32.totalorder %s21, 1
    %p232 = por %p230, %p231
    %p233 = scmp.ne.s32.totalorder %s224, %s225
    %p234 = scmp.eq.s32.totalorder %s21, 0
    %p235 = por %p233, %p234
    %p236 = scmp.ne.s32.totalorder %s224, %s225
    %p237 = scmp.eq.s32.totalorder %s22, 1
    %p238 = por %p236, %p237
    %p240 = scmp.ne.s32.totalorder %s225, %s239
    %p241 = scmp.eq.s32.totalorder %s22, 0
    %p242 = por %p240, %p241
    %s244 = sadd.s32 %s243, 1
    %p247 = scmp.eq.s32.totalorder %s16, 1
    %p248 = scmp.ne.s32.totalorder %s243, %s245
    %p249 = scmp.eq.s32.totalorder %s16, 0
    %p250 = por %p248, %p249
    %p251 = scmp.ne.s32.totalorder %s243, %s245
    %p252 = scmp.eq.s32.totalorder %s21, 1
    %p253 = por %p251, %p252
    %p254 = scmp.ne.s32.totalorder %s245, %s246
    %p255 = scmp.eq.s32.totalorder %s21, 0
    %p256 = por %p254, %p255
    %p257 = scmp.ne.s32.totalorder %s245, %s246
    %p258 = scmp.eq.s32.totalorder %s22, 1
    %p259 = por %p257, %p258
    %p261 = scmp.ne.s32.totalorder %s246, %s260
    %p262 = scmp.eq.s32.totalorder %s22, 0
    %p263 = por %p261, %p262
    %s264 = ssub.s32 %s23, %s35
    %s265 = ssub.s32 %s24, %s31
    %s266 = sor.u32 %s264, %s265
    %p267 = scmp.eq.s32.totalorder %s266, 0
    %s269 = sadd.s32 %s268, 1
    %s270 = scalar_select %p267, %s268, %s269
    %p273 = pneg %p267
    %p274 = scmp.eq.s32.totalorder %s16, 1
    %p275 = por %p273, %p274
    %p276 = scmp.ne.s32.totalorder %s268, %s271
    %p277 = scmp.eq.s32.totalorder %s16, 0
    %p278 = por %p276, %p277
    %p279 = scmp.ne.s32.totalorder %s268, %s271
    %p280 = scmp.eq.s32.totalorder %s21, 1
    %p281 = por %p279, %p280
    %p282 = scmp.ne.s32.totalorder %s271, %s272
    %p283 = scmp.eq.s32.totalorder %s21, 0
    %p284 = por %p282, %p283
    %p285 = scmp.ne.s32.totalorder %s271, %s272
    %p286 = scmp.eq.s32.totalorder %s22, 1
    %p287 = por %p285, %p286
    %p289 = scmp.ne.s32.totalorder %s272, %s288
    %p290 = scmp.eq.s32.totalorder %s22, 0
    %p291 = por %p289, %p290
    %p292 = scmp.le.s32.totalorder 1, %s16
    %p293 = scmp.lt.s32.totalorder %s16, 3
    %p294 = pnand %p292, %p293
    %p295 = pneg %p294
    // Predicated region
    $region9: #{conv_stem_forward.3} parent=5 // pred_check
      _
    $region10: #{conv_stem_forward.3} parent=5 // pred_check_branch
      %297 = sbr.rel (%p294) target = $region12
    $region11: #{conv_stem_forward.3} parent=5 // pred_region
      %s298 = ssub.s32 %s16, 1
      // Predicated region
      $region13: #{conv_stem_forward.3} parent=11 // pred_check
        %p299 = pneg %p109
      $region14: #{conv_stem_forward.3} parent=11 // pred_check_branch
        %301 = sbr.rel (%p299) target = $region16
      $region15: #{conv_stem_forward.3} parent=11 // pred_region
        _
      $region16: #{conv_stem_forward.3} parent=11 // pred_fallthru
        _
      // Predicated region
      $region17: #{conv_stem_forward.3} parent=11 // pred_check
        %p302 = pneg %p130
      $region18: #{conv_stem_forward.3} parent=11 // pred_check_branch
        %304 = sbr.rel (%p302) target = $region20
      $region19: #{conv_stem_forward.3} parent=11 // pred_region
        _
      $region20: #{conv_stem_forward.3} parent=11 // pred_fallthru
        _
      // Predicated region
      $region21: #{conv_stem_forward.3} parent=11 // pred_check
        %p305 = pneg %p151
      $region22: #{conv_stem_forward.3} parent=11 // pred_check_branch
        %307 = sbr.rel (%p305) target = $region24
      $region23: #{conv_stem_forward.3} parent=11 // pred_region
        _
      $region24: #{conv_stem_forward.3} parent=11 // pred_fallthru
        _
      // Predicated region
      $region25: #{conv_stem_forward.3} parent=11 // pred_check
        %p308 = pneg %p172
      $region26: #{conv_stem_forward.3} parent=11 // pred_check_branch
        %310 = sbr.rel (%p308) target = $region28
      $region27: #{conv_stem_forward.3} parent=11 // pred_region
        _
      $region28: #{conv_stem_forward.3} parent=11 // pred_fallthru
        _
      // Predicated region
      $region29: #{conv_stem_forward.3} parent=11 // pred_check
        %p311 = pneg %p193
      $region30: #{conv_stem_forward.3} parent=11 // pred_check_branch
        %313 = sbr.rel (%p311) target = $region32
      $region31: #{conv_stem_forward.3} parent=11 // pred_region
        _
      $region32: #{conv_stem_forward.3} parent=11 // pred_fallthru
        _
      // Predicated region
      $region33: #{conv_stem_forward.3} parent=11 // pred_check
        %p314 = pneg %p214
      $region34: #{conv_stem_forward.3} parent=11 // pred_check_branch
        %316 = sbr.rel (%p314) target = $region36
      $region35: #{conv_stem_forward.3} parent=11 // pred_region
        _
      $region36: #{conv_stem_forward.3} parent=11 // pred_fallthru
        _
      // Predicated region
      $region37: #{conv_stem_forward.3} parent=11 // pred_check
        %p317 = pneg %p235
      $region38: #{conv_stem_forward.3} parent=11 // pred_check_branch
        %319 = sbr.rel (%p317) target = $region40
      $region39: #{conv_stem_forward.3} parent=11 // pred_region
        _
      $region40: #{conv_stem_forward.3} parent=11 // pred_fallthru
        _
      // Predicated region
      $region41: #{conv_stem_forward.3} parent=11 // pred_check
        %p320 = pneg %p256
      $region42: #{conv_stem_forward.3} parent=11 // pred_check_branch
        %322 = sbr.rel (%p320) target = $region44
      $region43: #{conv_stem_forward.3} parent=11 // pred_region
        _
      $region44: #{conv_stem_forward.3} parent=11 // pred_fallthru
        _
    $region12: #{conv_stem_forward.3} parent=5 // pred_fallthru
      _
    %p323 = scmp.lt.s32.totalorder %s16, 2
    // Predicated region
    $region45: #{conv_stem_forward.3} parent=5 // pred_check
      %p324 = pneg %p323
    $region46: #{conv_stem_forward.3} parent=5 // pred_check_branch
      %326 = sbr.rel (%p324) target = $region48
    $region47: #{conv_stem_forward.3} parent=5 // pred_region
      // Predicated region
      $region49: #{conv_stem_forward.3} parent=47 // pred_check
        %p327 = pneg %p50
      $region50: #{conv_stem_forward.3} parent=47 // pred_check_branch
        %329 = sbr.rel (%p327) target = $region52
      $region51: #{conv_stem_forward.3} parent=47 // pred_region
        %s330 = smul.u32 4, %s24
        %s331 = ssub.s32 6, %s330
        %p332 = scmp.lt.s32.totalorder %s331, 4
        %s333 = scalar_select %p332, %s331, 4
        %s334 = smul.u32 64, %s333
        %s335 = smul.u32 %s334, 4
        %p336 = scmp.lt.s32.totalorder %s23, 1
        %s337 = scalar_select %p336, %s23, 1
        %p338 = scmp.lt.s32.totalorder %s330, 5
        %s339 = scalar_select %p338, %s330, 5
        %s340 = smul.addr %s339, 4
        %s341 = smul.addr %s337, 24
        %s342 = sadd.s32 %s340, %s341
        %s343 = smul.addr %s342, 4
        %s344 = scalar_lea.vmem %s0, %s343
        %s345 = smul.u32 4, %s24
        %s346 = ssub.s32 6, %s345
        %p347 = scmp.lt.s32.totalorder %s346, 4
        %s348 = scalar_select %p347, %s346, 4
        %s349 = smul.u32 64, %s348
        %s350 = smul.u32 %s349, 4
      $region52: #{conv_stem_forward.3} parent=47 // pred_fallthru
        _
      // Predicated region
      $region53: #{conv_stem_forward.3} parent=47 // pred_check
        %p351 = pneg %p82
      $region54: #{conv_stem_forward.3} parent=47 // pred_check_branch
        %353 = sbr.rel (%p351) target = $region56
      $region55: #{conv_stem_forward.3} parent=47 // pred_region
        %s354 = sadd.s32 %s24, 1
        %s355 = smul.u32 %s354, 2
        %s356 = smul.u32 2, %s355
        %p357 = scmp.lt.s32.totalorder %s23, 1
        %s358 = scalar_select %p357, %s23, 1
        %p359 = scmp.lt.s32.totalorder %s356, 5
        %s360 = scalar_select %p359, %s356, 5
        %s361 = smul.addr %s360, 4
        %s362 = smul.addr %s358, 24
        %s363 = sadd.s32 %s361, %s362
        %s364 = smul.addr %s363, 4
        %s365 = scalar_lea.vmem %s1, %s364
        %s366 = sadd.s32 %s24, 1
        %s367 = smul.u32 %s366, 2
        %s368 = smul.u32 2, %s367
      $region56: #{conv_stem_forward.3} parent=47 // pred_fallthru
        _
    $region48: #{conv_stem_forward.3} parent=5 // pred_fallthru
      _
    %p369 = scmp.le.s32.totalorder 1, %s16
    %p370 = scmp.lt.s32.totalorder %s16, 3
    %p371 = pnand %p369, %p370
    %p372 = pneg %p371
    // Predicated region
    $region57: #{conv_stem_forward.3} parent=5 // pred_check
      _
    $region58: #{conv_stem_forward.3} parent=5 // pred_check_branch
      %374 = sbr.rel (%p371) target = $region60
    $region59: #{conv_stem_forward.3} parent=5 // pred_region
      %s375 = ssub.s32 %s16, 1
      %s376 = smul.u32 4, %s26
      %s377 = ssub.s32 6, %s376
      %p378 = scmp.lt.s32.totalorder %s377, 4
      %s379 = scalar_select %p378, %s377, 4
      %s380 = smul.u32 64, %s379
      %s381 = smul.u32 %s380, 4
      %p382 = scmp.lt.s32.totalorder %s25, 1
      %s383 = scalar_select %p382, %s25, 1
      %p384 = scmp.lt.s32.totalorder %s376, 5
      %s385 = scalar_select %p384, %s376, 5
      %s386 = smul.addr %s385, 4
      %s387 = smul.addr %s383, 24
      %s388 = sadd.s32 %s386, %s387
      %s389 = smul.addr %s388, 4
      %s390 = scalar_lea.vmem %s0, %s389
      %p391 = pneg %p56
      %p392 = pneg %p53
      %s393 = sadd.s32 %s26, 1
      %s394 = smul.u32 %s393, 2
      %s395 = smul.u32 2, %s394
      %p396 = scmp.lt.s32.totalorder %s25, 1
      %s397 = scalar_select %p396, %s25, 1
      %p398 = scmp.lt.s32.totalorder %s395, 5
      %s399 = scalar_select %p398, %s395, 5
      %s400 = smul.addr %s399, 4
      %s401 = smul.addr %s397, 24
      %s402 = sadd.s32 %s400, %s401
      %s403 = smul.addr %s402, 4
      %s404 = scalar_lea.vmem %s1, %s403
      %p405 = pneg %p88
      %p406 = pneg %p85
      %p407 = pneg %p109
      %p408 = pneg %p106
      %p409 = pneg %p130
      %p410 = pneg %p127
      %p411 = pneg %p151
      %p412 = pneg %p148
      %p413 = pneg %p172
      %p414 = pneg %p169
      %p415 = pneg %p193
      %p416 = pneg %p190
      %p417 = pneg %p214
      %p418 = pneg %p211
      %p419 = pneg %p235
      %p420 = pneg %p232
      %p421 = pneg %p256
      %p422 = pneg %p253
      %p423 = pneg %p284
      %p424 = pneg %p281
      %s425 = smul.u32 4, %s26
      %p426 = scmp.lt.s32.totalorder %s25, 1
      %s427 = scalar_select %p426, %s25, 1
      %p428 = scmp.lt.s32.totalorder %s425, 3
      %s429 = scalar_select %p428, %s425, 3
      %s430 = smul.addr %s427, 4
      %s431 = sadd.s32 %s429, %s430
      %s432 = smul.addr %s431, 8
      %s433 = scalar_lea.vmem %s10, %s432
      %s434 = smul.u32 4, %s26
      %s435 = ssub.s32 6, %s434
      %p436 = scmp.lt.s32.totalorder %s435, 4
      %s437 = scalar_select %p436, %s435, 4
      %s438 = smul.u32 64, %s437
      %s439 = smul.u32 %s438, 4
      %p440 = scmp.lt.s32.totalorder %s25, 1
      %s441 = scalar_select %p440, %s25, 1
      %p442 = scmp.lt.s32.totalorder %s434, 5
      %s443 = scalar_select %p442, %s434, 5
      %s444 = smul.addr %s443, 4
      %s445 = smul.addr %s441, 24
      %s446 = sadd.s32 %s444, %s445
      %s447 = smul.addr %s446, 4
      %s448 = scalar_lea.vmem %s0, %s447
      %s449 = smul.u32 4, %s26
      %s450 = ssub.s32 6, %s449
      %p451 = scmp.lt.s32.totalorder %s450, 4
      %s452 = scalar_select %p451, %s450, 4
      %s453 = smul.u32 64, %s452
      %s454 = smul.u32 %s453, 4
      %s455 = sadd.s32 %s26, 1
      %s456 = smul.u32 %s455, 2
      %s457 = smul.u32 2, %s456
      %p458 = scmp.lt.s32.totalorder %s25, 1
      %s459 = scalar_select %p458, %s25, 1
      %p460 = scmp.lt.s32.totalorder %s457, 5
      %s461 = scalar_select %p460, %s457, 5
      %s462 = smul.addr %s461, 4
      %s463 = smul.addr %s459, 24
      %s464 = sadd.s32 %s462, %s463
      %s465 = smul.addr %s464, 4
      %s466 = scalar_lea.vmem %s1, %s465
      %s467 = sadd.s32 %s26, 1
      %s468 = smul.u32 %s467, 2
      %s469 = smul.u32 2, %s468
      %s470 = smul.u32 4, %s26
      %p471 = scmp.lt.s32.totalorder %s25, 1
      %s472 = scalar_select %p471, %s25, 1
      %p473 = scmp.lt.s32.totalorder %s470, 3
      %s474 = scalar_select %p473, %s470, 3
      %s475 = smul.addr %s472, 4
      %s476 = sadd.s32 %s474, %s475
      %s477 = smul.addr %s476, 8
      %s478 = scalar_lea.vmem %s10, %s477
      %s479 = smul.u32 4, %s26
      %v481 = vld [vmem:[%s448] sm:$0xff]
      %v482 = vld [vmem:[%s448 + $0x8] sm:$0xff]
      %v483 = vld [vmem:[%s448 + $0x10] sm:$0xff]
      %v484 = vld [vmem:[%s448 + $0x18] sm:$0xff]
      %v485 = vld [vmem:[%s448 + $0x20] sm:$0xff]
      %v486 = vld [vmem:[%s448 + $0x28] sm:$0xff]
      %v487 = vld [vmem:[%s448 + $0x30] sm:$0xff]
      %v488 = vld [vmem:[%s448 + $0x38] sm:$0xff]
      %489 = vst [vmem:[#allocation2] sm:$0xff] %v481
      %490 = vst [vmem:[#allocation2 + $0x8] sm:$0xff] %v482
      %491 = vst [vmem:[#allocation2 + $0x10] sm:$0xff] %v483
      %492 = vst [vmem:[#allocation2 + $0x18] sm:$0xff] %v484
      %493 = vst [vmem:[#allocation2 + $0x20] sm:$0xff] %v485
      %494 = vst [vmem:[#allocation2 + $0x28] sm:$0xff] %v486
      %495 = vst [vmem:[#allocation2 + $0x30] sm:$0xff] %v487
      %496 = vst [vmem:[#allocation2 + $0x38] sm:$0xff] %v488
      %v497 = vld [vmem:[%s466] sm:$0xff]
      %v498 = vld [vmem:[%s466 + $0x8] sm:$0xff]
      %v499 = vld [vmem:[%s466 + $0x10] sm:$0xff]
      %v500 = vld [vmem:[%s466 + $0x18] sm:$0xff]
      %501 = vst [vmem:[#allocation2 + $0x40] sm:$0xff] %v497
      %502 = vst [vmem:[#allocation2 + $0x48] sm:$0xff] %v498
      %503 = vst [vmem:[#allocation2 + $0x50] sm:$0xff] %v499
      %504 = vst [vmem:[#allocation2 + $0x58] sm:$0xff] %v500
      %v505 = vld [vmem:[#allocation2] sm:$0xff]
      %v506 = vld [vmem:[#allocation2 + $0x8] sm:$0xff]
      %v507 = vld [vmem:[#allocation2 + $0x10] sm:$0xff]
      %v508 = vld [vmem:[#allocation2 + $0x18] sm:$0xff]
      %v509 = vld [vmem:[#allocation2 + $0x20] sm:$0xff]
      %v510 = vld [vmem:[#allocation2 + $0x28] sm:$0xff]
      %v511 = vld [vmem:[#allocation2 + $0x30] sm:$0xff]
      %v512 = vld [vmem:[#allocation2 + $0x38] sm:$0xff]
      %v513 = vld [vmem:[%s2] sm:$0xf]
      %v514 = vld [vmem:[%s2 + $0x4] sm:$0xf]
      %v515 = vld [vmem:[%s2 + $0x8] sm:$0xf]
      %v516 = vld [vmem:[%s2 + $0xc] sm:$0xf]
      %v517 = vld [vmem:[%s2 + $0x10] sm:$0xf]
      %v518 = vld [vmem:[%s2 + $0x14] sm:$0xf]
      %v519 = vld [vmem:[%s2 + $0x18] sm:$0xf]
      %v520 = vld [vmem:[%s2 + $0x1c] sm:$0xf]
      %v521 = vld [vmem:[%s2 + $0x20] sm:$0xf]
      %v522 = vld [vmem:[%s2 + $0x24] sm:$0xf]
      %v523 = vld [vmem:[%s2 + $0x28] sm:$0xf]
      %v524 = vld [vmem:[%s2 + $0x2c] sm:$0xf]
      %v525 = vld [vmem:[%s2 + $0x30] sm:$0xf]
      %v526 = vld [vmem:[%s2 + $0x34] sm:$0xf]
      %v527 = vld [vmem:[%s2 + $0x38] sm:$0xf]
      %v528 = vld [vmem:[%s2 + $0x3c] sm:$0xf]
      %v529 = vld [vmem:[%s2 + $0x40] sm:$0xf]
      %v530 = vld [vmem:[%s2 + $0x44] sm:$0xf]
      %v531 = vld [vmem:[%s2 + $0x48] sm:$0xf]
      %v532 = vld [vmem:[%s2 + $0x4c] sm:$0xf]
      %v533 = vld [vmem:[%s2 + $0x50] sm:$0xf]
      %v534 = vld [vmem:[%s2 + $0x54] sm:$0xf]
      %v535 = vld [vmem:[%s2 + $0x58] sm:$0xf]
      %v536 = vld [vmem:[%s2 + $0x5c] sm:$0xf]
      %v537 = vld [vmem:[%s2 + $0x60] sm:$0xf]
      %v538 = vld [vmem:[%s2 + $0x64] sm:$0xf]
      %v539 = vld [vmem:[%s2 + $0x68] sm:$0xf]
      %v540 = vld [vmem:[%s2 + $0x6c] sm:$0xf]
      %v541 = vld [vmem:[%s2 + $0x70] sm:$0xf]
      %v542 = vld [vmem:[%s2 + $0x74] sm:$0xf]
      %v543 = vld [vmem:[%s2 + $0x78] sm:$0xf]
      %v544 = vld [vmem:[%s2 + $0x7c] sm:$0xf]
      %v545 = vld [vmem:[%s2 + $0x80] sm:$0xf]
      %v546 = vld [vmem:[%s2 + $0x84] sm:$0xf]
      %v547 = vld [vmem:[%s2 + $0x88] sm:$0xf]
      %v548 = vld [vmem:[%s2 + $0x8c] sm:$0xf]
      %v549 = vld [vmem:[%s2 + $0x90] sm:$0xf]
      %v550 = vld [vmem:[%s2 + $0x94] sm:$0xf]
      %v551 = vld [vmem:[%s2 + $0x98] sm:$0xf]
      %v552 = vld [vmem:[%s2 + $0x9c] sm:$0xf]
      %v553 = vld [vmem:[%s2 + $0xa0] sm:$0xf]
      %v554 = vld [vmem:[%s2 + $0xa4] sm:$0xf]
      %v555 = vld [vmem:[%s2 + $0xa8] sm:$0xf]
      %v556 = vld [vmem:[%s2 + $0xac] sm:$0xf]
      %v557 = vld [vmem:[%s2 + $0xb0] sm:$0xf]
      %v558 = vld [vmem:[%s2 + $0xb4] sm:$0xf]
      %v559 = vld [vmem:[%s2 + $0xb8] sm:$0xf]
      %v560 = vld [vmem:[%s2 + $0xbc] sm:$0xf]
      %v561 = vld [vmem:[%s2 + $0xc0] sm:$0xf]
      %v562 = vld [vmem:[%s2 + $0xc4] sm:$0xf]
      %v563 = vld [vmem:[%s2 + $0xc8] sm:$0xf]
      %v564 = vld [vmem:[%s2 + $0xcc] sm:$0xf]
      %v565 = vld [vmem:[%s2 + $0xd0] sm:$0xf]
      %v566 = vld [vmem:[%s2 + $0xd4] sm:$0xf]
      %v567 = vld [vmem:[%s2 + $0xd8] sm:$0xf]
      %v568 = vld [vmem:[%s2 + $0xdc] sm:$0xf]
      %v569 = vld [vmem:[%s2 + $0xe0] sm:$0xf]
      %v570 = vld [vmem:[%s2 + $0xe4] sm:$0xf]
      %v571 = vld [vmem:[%s2 + $0xe8] sm:$0xf]
      %v572 = vld [vmem:[%s2 + $0xec] sm:$0xf]
      %v573 = vld [vmem:[%s2 + $0xf0] sm:$0xf]
      %v574 = vld [vmem:[%s2 + $0xf4] sm:$0xf]
      %v575 = vld [vmem:[%s2 + $0xf8] sm:$0xf]
      %v576 = vld [vmem:[%s2 + $0xfc] sm:$0xf]
      %v577 = vld [vmem:[#allocation2 + $0x40] sm:$0x11]
      %v578 = vld [vmem:[%s3] sm:$0xf]
      %v579 = vld [vmem:[%s3 + $0x4] sm:$0xf]
      %v580 = vld [vmem:[%s3 + $0x8] sm:$0xf]
      %v581 = vld [vmem:[%s3 + $0xc] sm:$0xf]
      %v582 = vld [vmem:[%s3 + $0x10] sm:$0xf]
      %v583 = vld [vmem:[%s3 + $0x14] sm:$0xf]
      %v584 = vld [vmem:[%s3 + $0x18] sm:$0xf]
      %v585 = vld [vmem:[%s3 + $0x1c] sm:$0xf]
      %v586 = vld [vmem:[%s3 + $0x20] sm:$0xf]
      %v587 = vld [vmem:[%s3 + $0x24] sm:$0xf]
      %v588 = vld [vmem:[%s3 + $0x28] sm:$0xf]
      %v589 = vld [vmem:[%s3 + $0x2c] sm:$0xf]
      %v590 = vld [vmem:[%s3 + $0x30] sm:$0xf]
      %v591 = vld [vmem:[%s3 + $0x34] sm:$0xf]
      %v592 = vld [vmem:[%s3 + $0x38] sm:$0xf]
      %v593 = vld [vmem:[%s3 + $0x3c] sm:$0xf]
      %v594 = vld [vmem:[%s3 + $0x40] sm:$0xf]
      %v595 = vld [vmem:[%s3 + $0x44] sm:$0xf]
      %v596 = vld [vmem:[%s3 + $0x48] sm:$0xf]
      %v597 = vld [vmem:[%s3 + $0x4c] sm:$0xf]
      %v598 = vld [vmem:[%s3 + $0x50] sm:$0xf]
      %v599 = vld [vmem:[%s3 + $0x54] sm:$0xf]
      %v600 = vld [vmem:[%s3 + $0x58] sm:$0xf]
      %v601 = vld [vmem:[%s3 + $0x5c] sm:$0xf]
      %v602 = vld [vmem:[%s3 + $0x60] sm:$0xf]
      %v603 = vld [vmem:[%s3 + $0x64] sm:$0xf]
      %v604 = vld [vmem:[%s3 + $0x68] sm:$0xf]
      %v605 = vld [vmem:[%s3 + $0x6c] sm:$0xf]
      %v606 = vld [vmem:[%s3 + $0x70] sm:$0xf]
      %v607 = vld [vmem:[%s3 + $0x74] sm:$0xf]
      %v608 = vld [vmem:[%s3 + $0x78] sm:$0xf]
      %v609 = vld [vmem:[%s3 + $0x7c] sm:$0xf]
      %v615 = vunpack.c.l.b16 %v505
      %v616 = vunpack.c.h.b16 %v505
      %v617 = vunpack.c.l.b16 %v507
      %v618 = vunpack.c.h.b16 %v507
      %v619 = vunpack.c.l.b16 %v509
      %v620 = vunpack.c.h.b16 %v509
      %v621 = vunpack.c.l.b16 %v511
      %v622 = vunpack.c.h.b16 %v511
      %v623 = vunpack.c.l.b16 %v577
      %v624 = vunpack.c.h.b16 %v577
      %v625 = vpack.c.b16 %v617, %v615
      %v626 = vpack.c.b16 %v618, %v616
      %v627 = vpack.c.b16 %v621, %v619
      %v628 = vpack.c.b16 %v622, %v620
      %v629 = vpack.c.b16 %v623, %v623
      %v630 = vpack.c.b16 %v624, %v624
      %vm631 = vsmask.f32 7424
      %v633 = vshrl.u32 %v625, 16
      %v635 = vshll.u32 %v625, 16
      %v637 = vrot.slane %v635, 1
      %v638 = vor.u32 %v633, %v637
      %v640 = vshll.u32 %v627, 16
      %v642 = vrot.slane %v640, 1
      %v643 = vsel %vm631, %v638, %v642
      %v645 = vshrl.u32 %v626, 16
      %v647 = vshll.u32 %v626, 16
      %v649 = vrot.slane %v647, 1
      %v650 = vor.u32 %v645, %v649
      %v652 = vshll.u32 %v628, 16
      %v654 = vrot.slane %v652, 1
      %v655 = vsel %vm631, %v650, %v654
      %v656 = vshrl.u32 %v627, 16
      %v658 = vor.u32 %v656, %v642
      %v660 = vshll.u32 %v629, 16
      %v662 = vrot.slane %v660, 1
      %v663 = vsel %vm631, %v658, %v662
      %v664 = vshrl.u32 %v628, 16
      %v666 = vor.u32 %v664, %v654
      %v668 = vshll.u32 %v630, 16
      %v670 = vrot.slane %v668, 1
      %v671 = vsel %vm631, %v666, %v670
      %v708 = vunpack.c.l.b16 %v578
      %v709 = vunpack.c.l.b16 %v579
      %v710 = vunpack.c.l.b16 %v580
      %v711 = vunpack.c.l.b16 %v581
      %v712 = vunpack.c.l.b16 %v582
      %v713 = vunpack.c.l.b16 %v583
      %v714 = vunpack.c.l.b16 %v584
      %v715 = vunpack.c.l.b16 %v585
      %v716 = vunpack.c.l.b16 %v586
      %v717 = vunpack.c.l.b16 %v587
      %v718 = vunpack.c.l.b16 %v588
      %v719 = vunpack.c.l.b16 %v589
      %v720 = vunpack.c.l.b16 %v590
      %v721 = vunpack.c.l.b16 %v591
      %v722 = vunpack.c.l.b16 %v592
      %v723 = vunpack.c.l.b16 %v593
      %v724 = vunpack.c.l.b16 %v594
      %v725 = vunpack.c.l.b16 %v595
      %v726 = vunpack.c.l.b16 %v596
      %v727 = vunpack.c.l.b16 %v597
      %v728 = vunpack.c.l.b16 %v598
      %v729 = vunpack.c.l.b16 %v599
      %v730 = vunpack.c.l.b16 %v600
      %v731 = vunpack.c.l.b16 %v601
      %v732 = vunpack.c.l.b16 %v602
      %v733 = vunpack.c.l.b16 %v603
      %v734 = vunpack.c.l.b16 %v604
      %v735 = vunpack.c.l.b16 %v605
      %v736 = vunpack.c.l.b16 %v606
      %v737 = vunpack.c.l.b16 %v607
      %v738 = vunpack.c.l.b16 %v608
      %v739 = vunpack.c.l.b16 %v609
      %v740 = vpack.c.b16 %v709, %v708
      %v741 = vpack.c.b16 %v711, %v710
      %v742 = vpack.c.b16 %v713, %v712
      %v743 = vpack.c.b16 %v715, %v714
      %v744 = vpack.c.b16 %v717, %v716
      %v745 = vpack.c.b16 %v719, %v718
      %v746 = vpack.c.b16 %v721, %v720
      %v747 = vpack.c.b16 %v723, %v722
      %v748 = vpack.c.b16 %v725, %v724
      %v749 = vpack.c.b16 %v727, %v726
      %v750 = vpack.c.b16 %v729, %v728
      %v751 = vpack.c.b16 %v731, %v730
      %v752 = vpack.c.b16 %v733, %v732
      %v753 = vpack.c.b16 %v735, %v734
      %v754 = vpack.c.b16 %v737, %v736
      %v755 = vpack.c.b16 %v739, %v738
      %772 = vmatprep.subr.bf16.mxu0 0
      %773 = vmatpush1.bf16.msra.mxu0 %v747
      %774 = vmatprep.subr.bf16.mxu0 0
      %775 = vmatpush1.bf16.msra.mxu0 %v746
      %776 = vmatprep.subr.bf16.mxu0 0
      %777 = vmatpush1.bf16.msra.mxu0 %v745
      %778 = vmatprep.subr.bf16.mxu0 0
      %779 = vmatpush1.bf16.msra.mxu0 %v744
      %780 = vmatprep.subr.bf16.mxu0 0
      %781 = vmatpush1.bf16.msra.mxu0 %v743
      %782 = vmatprep.subr.bf16.mxu0 0
      %783 = vmatpush1.bf16.msra.mxu0 %v742
      %784 = vmatprep.subr.bf16.mxu0 0
      %785 = vmatpush1.bf16.msra.mxu0 %v741
      %786 = vmatprep.subr.bf16.mxu0 0
      %787 = vmatpush1.bf16.msra.mxu0 %v740
      %788 = vmatprep.subr.bf16.mxu0 0
      %789 = vmatpush2.bf16.msra.mxu0 %v755
      %790 = vmatprep.subr.bf16.mxu0 0
      %791 = vmatpush2.bf16.msra.mxu0 %v754
      %792 = vmatprep.subr.bf16.mxu0 0
      %793 = vmatpush2.bf16.msra.mxu0 %v753
      %794 = vmatprep.subr.bf16.mxu0 0
      %795 = vmatpush2.bf16.msra.mxu0 %v752
      %796 = vmatprep.subr.bf16.mxu0 0
      %797 = vmatpush2.bf16.msra.mxu0 %v751
      %798 = vmatprep.subr.bf16.mxu0 0
      %799 = vmatpush2.bf16.msra.mxu0 %v750
      %800 = vmatprep.subr.bf16.mxu0 0
      %801 = vmatpush2.bf16.msra.mxu0 %v749
      %802 = vmatprep.subr.bf16.mxu0 0
      %803 = vmatpush2.bf16.msra.mxu0 %v748
      %804 = vmatprep.mubr.bf16.mxu0 %v655
      %805 = vmatmul.mubr.bf16.gmra.mxu0 %v643
      %v806 = vpop.f32.mrf.mxu0
      %v807 = vadd.f32 0.0, %v806
      %v808 = vpop.f32.mrf.mxu0
      %v809 = vpop.f32.mrf.mxu0
      %v810 = vadd.f32 0.0, %v809
      %v811 = vpop.f32.mrf.mxu0
      %812 = vmatprep.mubr.bf16.mxu0 %v671
      %813 = vmatmul.mubr.bf16.gmra.mxu0 %v663
      %v814 = vpop.f32.mrf.mxu0
      %v815 = vadd.f32 0.0, %v814
      %v816 = vpop.f32.mrf.mxu0
      %v817 = vpop.f32.mrf.mxu0
      %v818 = vadd.f32 0.0, %v817
      %v819 = vpop.f32.mrf.mxu0
      %820 = vdwg.mxu0
      %v825 = vunpack.c.l.b16 %v506
      %v826 = vunpack.c.h.b16 %v506
      %v827 = vunpack.c.l.b16 %v508
      %v828 = vunpack.c.h.b16 %v508
      %v829 = vunpack.c.l.b16 %v510
      %v830 = vunpack.c.h.b16 %v510
      %v831 = vunpack.c.l.b16 %v512
      %v832 = vunpack.c.h.b16 %v512
      %v833 = vpack.c.b16 %v827, %v825
      %v834 = vpack.c.b16 %v828, %v826
      %v835 = vpack.c.b16 %v831, %v829
      %v836 = vpack.c.b16 %v832, %v830
      %v909 = vunpack.c.l.b16 %v513
      %v910 = vunpack.c.l.b16 %v514
      %v911 = vunpack.c.l.b16 %v515
      %v912 = vunpack.c.l.b16 %v516
      %v913 = vunpack.c.l.b16 %v517
      %v914 = vunpack.c.l.b16 %v518
      %v915 = vunpack.c.l.b16 %v519
      %v916 = vunpack.c.l.b16 %v520
      %v917 = vunpack.c.l.b16 %v521
      %v918 = vunpack.c.l.b16 %v522
      %v919 = vunpack.c.l.b16 %v523
      %v920 = vunpack.c.l.b16 %v524
      %v921 = vunpack.c.l.b16 %v525
      %v922 = vunpack.c.l.b16 %v526
      %v923 = vunpack.c.l.b16 %v527
      %v924 = vunpack.c.l.b16 %v528
      %v925 = vunpack.c.l.b16 %v529
      %v926 = vunpack.c.l.b16 %v530
      %v927 = vunpack.c.l.b16 %v531
      %v928 = vunpack.c.l.b16 %v532
      %v929 = vunpack.c.l.b16 %v533
      %v930 = vunpack.c.l.b16 %v534
      %v931 = vunpack.c.l.b16 %v535
      %v932 = vunpack.c.l.b16 %v536
      %v933 = vunpack.c.l.b16 %v537
      %v934 = vunpack.c.l.b16 %v538
      %v935 = vunpack.c.l.b16 %v539
      %v936 = vunpack.c.l.b16 %v540
      %v937 = vunpack.c.l.b16 %v541
      %v938 = vunpack.c.l.b16 %v542
      %v939 = vunpack.c.l.b16 %v543
      %v940 = vunpack.c.l.b16 %v544
      %v941 = vunpack.c.l.b16 %v545
      %v942 = vunpack.c.l.b16 %v546
      %v943 = vunpack.c.l.b16 %v547
      %v944 = vunpack.c.l.b16 %v548
      %v945 = vunpack.c.l.b16 %v549
      %v946 = vunpack.c.l.b16 %v550
      %v947 = vunpack.c.l.b16 %v551
      %v948 = vunpack.c.l.b16 %v552
      %v949 = vunpack.c.l.b16 %v553
      %v950 = vunpack.c.l.b16 %v554
      %v951 = vunpack.c.l.b16 %v555
      %v952 = vunpack.c.l.b16 %v556
      %v953 = vunpack.c.l.b16 %v557
      %v954 = vunpack.c.l.b16 %v558
      %v955 = vunpack.c.l.b16 %v559
      %v956 = vunpack.c.l.b16 %v560
      %v957 = vunpack.c.l.b16 %v561
      %v958 = vunpack.c.l.b16 %v562
      %v959 = vunpack.c.l.b16 %v563
      %v960 = vunpack.c.l.b16 %v564
      %v961 = vunpack.c.l.b16 %v565
      %v962 = vunpack.c.l.b16 %v566
      %v963 = vunpack.c.l.b16 %v567
      %v964 = vunpack.c.l.b16 %v568
      %v965 = vunpack.c.l.b16 %v569
      %v966 = vunpack.c.l.b16 %v570
      %v967 = vunpack.c.l.b16 %v571
      %v968 = vunpack.c.l.b16 %v572
      %v969 = vunpack.c.l.b16 %v573
      %v970 = vunpack.c.l.b16 %v574
      %v971 = vunpack.c.l.b16 %v575
      %v972 = vunpack.c.l.b16 %v576
      %v973 = vpack.c.b16 %v910, %v909
      %v974 = vpack.c.b16 %v912, %v911
      %v975 = vpack.c.b16 %v914, %v913
      %v976 = vpack.c.b16 %v916, %v915
      %v977 = vpack.c.b16 %v918, %v917
      %v978 = vpack.c.b16 %v920, %v919
      %v979 = vpack.c.b16 %v922, %v921
      %v980 = vpack.c.b16 %v924, %v923
      %v981 = vpack.c.b16 %v926, %v925
      %v982 = vpack.c.b16 %v928, %v927
      %v983 = vpack.c.b16 %v930, %v929
      %v984 = vpack.c.b16 %v932, %v931
      %v985 = vpack.c.b16 %v934, %v933
      %v986 = vpack.c.b16 %v936, %v935
      %v987 = vpack.c.b16 %v938, %v937
      %v988 = vpack.c.b16 %v940, %v939
      %v989 = vpack.c.b16 %v942, %v941
      %v990 = vpack.c.b16 %v944, %v943
      %v991 = vpack.c.b16 %v946, %v945
      %v992 = vpack.c.b16 %v948, %v947
      %v993 = vpack.c.b16 %v950, %v949
      %v994 = vpack.c.b16 %v952, %v951
      %v995 = vpack.c.b16 %v954, %v953
      %v996 = vpack.c.b16 %v956, %v955
      %v997 = vpack.c.b16 %v958, %v957
      %v998 = vpack.c.b16 %v960, %v959
      %v999 = vpack.c.b16 %v962, %v961
      %v1000 = vpack.c.b16 %v964, %v963
      %v1001 = vpack.c.b16 %v966, %v965
      %v1002 = vpack.c.b16 %v968, %v967
      %v1003 = vpack.c.b16 %v970, %v969
      %v1004 = vpack.c.b16 %v972, %v971
      %1037 = vmatprep.subr.bf16.mxu0 0
      %1038 = vmatpush1.bf16.msra.mxu0 %v980
      %1039 = vmatprep.subr.bf16.mxu0 0
      %1040 = vmatpush1.bf16.msra.mxu0 %v979
      %1041 = vmatprep.subr.bf16.mxu0 0
      %1042 = vmatpush1.bf16.msra.mxu0 %v978
      %1043 = vmatprep.subr.bf16.mxu0 0
      %1044 = vmatpush1.bf16.msra.mxu0 %v977
      %1045 = vmatprep.subr.bf16.mxu0 0
      %1046 = vmatpush1.bf16.msra.mxu0 %v976
      %1047 = vmatprep.subr.bf16.mxu0 0
      %1048 = vmatpush1.bf16.msra.mxu0 %v975
      %1049 = vmatprep.subr.bf16.mxu0 0
      %1050 = vmatpush1.bf16.msra.mxu0 %v974
      %1051 = vmatprep.subr.bf16.mxu0 0
      %1052 = vmatpush1.bf16.msra.mxu0 %v973
      %1053 = vmatprep.subr.bf16.mxu0 0
      %1054 = vmatpush2.bf16.msra.mxu0 %v988
      %1055 = vmatprep.subr.bf16.mxu0 0
      %1056 = vmatpush2.bf16.msra.mxu0 %v987
      %1057 = vmatprep.subr.bf16.mxu0 0
      %1058 = vmatpush2.bf16.msra.mxu0 %v986
      %1059 = vmatprep.subr.bf16.mxu0 0
      %1060 = vmatpush2.bf16.msra.mxu0 %v985
      %1061 = vmatprep.subr.bf16.mxu0 0
      %1062 = vmatpush2.bf16.msra.mxu0 %v984
      %1063 = vmatprep.subr.bf16.mxu0 0
      %1064 = vmatpush2.bf16.msra.mxu0 %v983
      %1065 = vmatprep.subr.bf16.mxu0 0
      %1066 = vmatpush2.bf16.msra.mxu0 %v982
      %1067 = vmatprep.subr.bf16.mxu0 0
      %1068 = vmatpush2.bf16.msra.mxu0 %v981
      %1069 = vmatprep.mubr.bf16.mxu0 %v626
      %1070 = vmatmul.mubr.bf16.gmra.mxu0 %v625
      %v1071 = vpop.f32.mrf.mxu0
      %v1072 = vadd.f32 %v807, %v1071
      %v1073 = vpop.f32.mrf.mxu0
      %v1074 = vpop.f32.mrf.mxu0
      %v1075 = vadd.f32 %v810, %v1074
      %v1076 = vpop.f32.mrf.mxu0
      %1077 = vmatprep.mubr.bf16.mxu0 %v628
      %1078 = vmatmul.mubr.bf16.gmra.mxu0 %v627
      %v1079 = vpop.f32.mrf.mxu0
      %v1080 = vadd.f32 %v815, %v1079
      %v1081 = vpop.f32.mrf.mxu0
      %v1082 = vpop.f32.mrf.mxu0
      %v1083 = vadd.f32 %v818, %v1082
      %v1084 = vpop.f32.mrf.mxu0
      %1085 = vdwg.mxu0
      %1086 = vmatprep.subr.bf16.mxu0 0
      %1087 = vmatpush1.bf16.msra.mxu0 %v996
      %1088 = vmatprep.subr.bf16.mxu0 0
      %1089 = vmatpush1.bf16.msra.mxu0 %v995
      %1090 = vmatprep.subr.bf16.mxu0 0
      %1091 = vmatpush1.bf16.msra.mxu0 %v994
      %1092 = vmatprep.subr.bf16.mxu0 0
      %1093 = vmatpush1.bf16.msra.mxu0 %v993
      %1094 = vmatprep.subr.bf16.mxu0 0
      %1095 = vmatpush1.bf16.msra.mxu0 %v992
      %1096 = vmatprep.subr.bf16.mxu0 0
      %1097 = vmatpush1.bf16.msra.mxu0 %v991
      %1098 = vmatprep.subr.bf16.mxu0 0
      %1099 = vmatpush1.bf16.msra.mxu0 %v990
      %1100 = vmatprep.subr.bf16.mxu0 0
      %1101 = vmatpush1.bf16.msra.mxu0 %v989
      %1102 = vmatprep.subr.bf16.mxu0 0
      %1103 = vmatpush2.bf16.msra.mxu0 %v1004
      %1104 = vmatprep.subr.bf16.mxu0 0
      %1105 = vmatpush2.bf16.msra.mxu0 %v1003
      %1106 = vmatprep.subr.bf16.mxu0 0
      %1107 = vmatpush2.bf16.msra.mxu0 %v1002
      %1108 = vmatprep.subr.bf16.mxu0 0
      %1109 = vmatpush2.bf16.msra.mxu0 %v1001
      %1110 = vmatprep.subr.bf16.mxu0 0
      %1111 = vmatpush2.bf16.msra.mxu0 %v1000
      %1112 = vmatprep.subr.bf16.mxu0 0
      %1113 = vmatpush2.bf16.msra.mxu0 %v999
      %1114 = vmatprep.subr.bf16.mxu0 0
      %1115 = vmatpush2.bf16.msra.mxu0 %v998
      %1116 = vmatprep.subr.bf16.mxu0 0
      %1117 = vmatpush2.bf16.msra.mxu0 %v997
      %1118 = vmatprep.mubr.bf16.mxu0 %v834
      %1119 = vmatmul.mubr.bf16.gmra.mxu0 %v833
      %v1120 = vpop.f32.mrf.mxu0
      %v1121 = vadd.f32 %v1072, %v1120
      %v1122 = vpop.f32.mrf.mxu0
      %v1123 = vpop.f32.mrf.mxu0
      %v1124 = vadd.f32 %v1075, %v1123
      %v1125 = vpop.f32.mrf.mxu0
      %1126 = vmatprep.mubr.bf16.mxu0 %v836
      %1127 = vmatmul.mubr.bf16.gmra.mxu0 %v835
      %v1128 = vpop.f32.mrf.mxu0
      %v1129 = vadd.f32 %v1080, %v1128
      %v1130 = vpop.f32.mrf.mxu0
      %v1131 = vpop.f32.mrf.mxu0
      %v1132 = vadd.f32 %v1083, %v1131
      %v1133 = vpop.f32.mrf.mxu0
      %1134 = vdwg.mxu0
      %v1135 = vld [vmem:[#allocation2 + $0x4] sm:$0xcc]
      %v1136 = vld [vmem:[#allocation2 + $0x14] sm:$0xff]
      %v1137 = vld [vmem:[#allocation2 + $0x24] sm:$0xff]
      %v1138 = vld [vmem:[#allocation2 + $0x34] sm:$0xff]
      %v1139 = vld [vmem:[#allocation2 + $0x44] sm:$0x77]
      %v1140 = vld [vmem:[%s4] sm:$0xf]
      %v1141 = vld [vmem:[%s4 + $0x4] sm:$0xf]
      %v1142 = vld [vmem:[%s4 + $0x8] sm:$0xf]
      %v1143 = vld [vmem:[%s4 + $0xc] sm:$0xf]
      %v1144 = vld [vmem:[%s4 + $0x10] sm:$0xf]
      %v1145 = vld [vmem:[%s4 + $0x14] sm:$0xf]
      %v1146 = vld [vmem:[%s4 + $0x18] sm:$0xf]
      %v1147 = vld [vmem:[%s4 + $0x1c] sm:$0xf]
      %v1148 = vld [vmem:[%s4 + $0x20] sm:$0xf]
      %v1149 = vld [vmem:[%s4 + $0x24] sm:$0xf]
      %v1150 = vld [vmem:[%s4 + $0x28] sm:$0xf]
      %v1151 = vld [vmem:[%s4 + $0x2c] sm:$0xf]
      %v1152 = vld [vmem:[%s4 + $0x30] sm:$0xf]
      %v1153 = vld [vmem:[%s4 + $0x34] sm:$0xf]
      %v1154 = vld [vmem:[%s4 + $0x38] sm:$0xf]
      %v1155 = vld [vmem:[%s4 + $0x3c] sm:$0xf]
      %v1156 = vld [vmem:[%s4 + $0x40] sm:$0xf]
      %v1157 = vld [vmem:[%s4 + $0x44] sm:$0xf]
      %v1158 = vld [vmem:[%s4 + $0x48] sm:$0xf]
      %v1159 = vld [vmem:[%s4 + $0x4c] sm:$0xf]
      %v1160 = vld [vmem:[%s4 + $0x50] sm:$0xf]
      %v1161 = vld [vmem:[%s4 + $0x54] sm:$0xf]
      %v1162 = vld [vmem:[%s4 + $0x58] sm:$0xf]
      %v1163 = vld [vmem:[%s4 + $0x5c] sm:$0xf]
      %v1164 = vld [vmem:[%s4 + $0x60] sm:$0xf]
      %v1165 = vld [vmem:[%s4 + $0x64] sm:$0xf]
      %v1166 = vld [vmem:[%s4 + $0x68] sm:$0xf]
      %v1167 = vld [vmem:[%s4 + $0x6c] sm:$0xf]
      %v1168 = vld [vmem:[%s4 + $0x70] sm:$0xf]
      %v1169 = vld [vmem:[%s4 + $0x74] sm:$0xf]
      %v1170 = vld [vmem:[%s4 + $0x78] sm:$0xf]
      %v1171 = vld [vmem:[%s4 + $0x7c] sm:$0xf]
      %v1177 = vunpack.c.l.b16 %v1135
      %v1178 = vunpack.c.h.b16 %v1135
      %v1179 = vunpack.c.l.b16 %v1136
      %v1180 = vunpack.c.h.b16 %v1136
      %v1181 = vunpack.c.l.b16 %v1137
      %v1182 = vunpack.c.h.b16 %v1137
      %v1183 = vunpack.c.l.b16 %v1138
      %v1184 = vunpack.c.h.b16 %v1138
      %v1185 = vunpack.c.l.b16 %v1139
      %v1186 = vunpack.c.h.b16 %v1139
      %v1187 = vpack.c.b16 %v1179, %v1177
      %v1188 = vpack.c.b16 %v1180, %v1178
      %v1189 = vpack.c.b16 %v1183, %v1181
      %v1190 = vpack.c.b16 %v1184, %v1182
      %v1191 = vpack.c.b16 %v1185, %v1185
      %v1192 = vpack.c.b16 %v1186, %v1186
      %vm1193 = vsmask.f32 5376
      %v1195 = vshrl.u32 %v1187, 16
      %v1197 = vrot.slane %v1195, 2
      %v1198 = vshll.u32 %v1187, 16
      %v1200 = vrot.slane %v1198, 3
      %v1201 = vor.u32 %v1197, %v1200
      %v1203 = vshrl.u32 %v1189, 16
      %v1205 = vrot.slane %v1203, 2
      %v1206 = vshll.u32 %v1189, 16
      %v1208 = vrot.slane %v1206, 3
      %v1209 = vor.u32 %v1205, %v1208
      %v1210 = vsel %vm1193, %v1201, %v1209
      %v1212 = vshrl.u32 %v1188, 16
      %v1214 = vrot.slane %v1212, 2
      %v1215 = vshll.u32 %v1188, 16
      %v1217 = vrot.slane %v1215, 3
      %v1218 = vor.u32 %v1214, %v1217
      %v1220 = vshrl.u32 %v1190, 16
      %v1222 = vrot.slane %v1220, 2
      %v1223 = vshll.u32 %v1190, 16
      %v1225 = vrot.slane %v1223, 3
      %v1226 = vor.u32 %v1222, %v1225
      %v1227 = vsel %vm1193, %v1218, %v1226
      %v1229 = vshrl.u32 %v1191, 16
      %v1231 = vrot.slane %v1229, 2
      %v1232 = vshll.u32 %v1191, 16
      %v1234 = vrot.slane %v1232, 3
      %v1235 = vor.u32 %v1231, %v1234
      %v1236 = vsel %vm1193, %v1209, %v1235
      %v1238 = vshrl.u32 %v1192, 16
      %v1240 = vrot.slane %v1238, 2
      %v1241 = vshll.u32 %v1192, 16
      %v1243 = vrot.slane %v1241, 3
      %v1244 = vor.u32 %v1240, %v1243
      %v1245 = vsel %vm1193, %v1226, %v1244
      %v1282 = vunpack.c.l.b16 %v1140
      %v1283 = vunpack.c.l.b16 %v1141
      %v1284 = vunpack.c.l.b16 %v1142
      %v1285 = vunpack.c.l.b16 %v1143
      %v1286 = vunpack.c.l.b16 %v1144
      %v1287 = vunpack.c.l.b16 %v1145
      %v1288 = vunpack.c.l.b16 %v1146
      %v1289 = vunpack.c.l.b16 %v1147
      %v1290 = vunpack.c.l.b16 %v1148
      %v1291 = vunpack.c.l.b16 %v1149
      %v1292 = vunpack.c.l.b16 %v1150
      %v1293 = vunpack.c.l.b16 %v1151
      %v1294 = vunpack.c.l.b16 %v1152
      %v1295 = vunpack.c.l.b16 %v1153
      %v1296 = vunpack.c.l.b16 %v1154
      %v1297 = vunpack.c.l.b16 %v1155
      %v1298 = vunpack.c.l.b16 %v1156
      %v1299 = vunpack.c.l.b16 %v1157
      %v1300 = vunpack.c.l.b16 %v1158
      %v1301 = vunpack.c.l.b16 %v1159
      %v1302 = vunpack.c.l.b16 %v1160
      %v1303 = vunpack.c.l.b16 %v1161
      %v1304 = vunpack.c.l.b16 %v1162
      %v1305 = vunpack.c.l.b16 %v1163
      %v1306 = vunpack.c.l.b16 %v1164
      %v1307 = vunpack.c.l.b16 %v1165
      %v1308 = vunpack.c.l.b16 %v1166
      %v1309 = vunpack.c.l.b16 %v1167
      %v1310 = vunpack.c.l.b16 %v1168
      %v1311 = vunpack.c.l.b16 %v1169
      %v1312 = vunpack.c.l.b16 %v1170
      %v1313 = vunpack.c.l.b16 %v1171
      %v1314 = vpack.c.b16 %v1283, %v1282
      %v1315 = vpack.c.b16 %v1285, %v1284
      %v1316 = vpack.c.b16 %v1287, %v1286
      %v1317 = vpack.c.b16 %v1289, %v1288
      %v1318 = vpack.c.b16 %v1291, %v1290
      %v1319 = vpack.c.b16 %v1293, %v1292
      %v1320 = vpack.c.b16 %v1295, %v1294
      %v1321 = vpack.c.b16 %v1297, %v1296
      %v1322 = vpack.c.b16 %v1299, %v1298
      %v1323 = vpack.c.b16 %v1301, %v1300
      %v1324 = vpack.c.b16 %v1303, %v1302
      %v1325 = vpack.c.b16 %v1305, %v1304
      %v1326 = vpack.c.b16 %v1307, %v1306
      %v1327 = vpack.c.b16 %v1309, %v1308
      %v1328 = vpack.c.b16 %v1311, %v1310
      %v1329 = vpack.c.b16 %v1313, %v1312
      %1346 = vmatprep.subr.bf16.mxu0 0
      %1347 = vmatpush1.bf16.msra.mxu0 %v1321
      %1348 = vmatprep.subr.bf16.mxu0 0
      %1349 = vmatpush1.bf16.msra.mxu0 %v1320
      %1350 = vmatprep.subr.bf16.mxu0 0
      %1351 = vmatpush1.bf16.msra.mxu0 %v1319
      %1352 = vmatprep.subr.bf16.mxu0 0
      %1353 = vmatpush1.bf16.msra.mxu0 %v1318
      %1354 = vmatprep.subr.bf16.mxu0 0
      %1355 = vmatpush1.bf16.msra.mxu0 %v1317
      %1356 = vmatprep.subr.bf16.mxu0 0
      %1357 = vmatpush1.bf16.msra.mxu0 %v1316
      %1358 = vmatprep.subr.bf16.mxu0 0
      %1359 = vmatpush1.bf16.msra.mxu0 %v1315
      %1360 = vmatprep.subr.bf16.mxu0 0
      %1361 = vmatpush1.bf16.msra.mxu0 %v1314
      %1362 = vmatprep.subr.bf16.mxu0 0
      %1363 = vmatpush2.bf16.msra.mxu0 %v1329
      %1364 = vmatprep.subr.bf16.mxu0 0
      %1365 = vmatpush2.bf16.msra.mxu0 %v1328
      %1366 = vmatprep.subr.bf16.mxu0 0
      %1367 = vmatpush2.bf16.msra.mxu0 %v1327
      %1368 = vmatprep.subr.bf16.mxu0 0
      %1369 = vmatpush2.bf16.msra.mxu0 %v1326
      %1370 = vmatprep.subr.bf16.mxu0 0
      %1371 = vmatpush2.bf16.msra.mxu0 %v1325
      %1372 = vmatprep.subr.bf16.mxu0 0
      %1373 = vmatpush2.bf16.msra.mxu0 %v1324
      %1374 = vmatprep.subr.bf16.mxu0 0
      %1375 = vmatpush2.bf16.msra.mxu0 %v1323
      %1376 = vmatprep.subr.bf16.mxu0 0
      %1377 = vmatpush2.bf16.msra.mxu0 %v1322
      %1378 = vmatprep.mubr.bf16.mxu0 %v1227
      %1379 = vmatmul.mubr.bf16.gmra.mxu0 %v1210
      %v1380 = vpop.f32.mrf.mxu0
      %v1381 = vadd.f32 0.0, %v1380
      %v1382 = vpop.f32.mrf.mxu0
      %v1383 = vpop.f32.mrf.mxu0
      %v1384 = vadd.f32 0.0, %v1383
      %v1385 = vpop.f32.mrf.mxu0
      %1386 = vmatprep.mubr.bf16.mxu0 %v1245
      %1387 = vmatmul.mubr.bf16.gmra.mxu0 %v1236
      %v1388 = vpop.f32.mrf.mxu0
      %v1389 = vadd.f32 0.0, %v1388
      %v1390 = vpop.f32.mrf.mxu0
      %v1391 = vpop.f32.mrf.mxu0
      %v1392 = vadd.f32 0.0, %v1391
      %v1393 = vpop.f32.mrf.mxu0
      %1394 = vdwg.mxu0
      %v1395 = vadd.f32 %v1121, %v1381
      %v1396 = vadd.f32 %v1124, %v1384
      %v1397 = vadd.f32 %v1129, %v1389
      %v1398 = vadd.f32 %v1132, %v1392
      %v1399 = vld [vmem:[#allocation2 + $0x4] sm:$0x8]
      %v1400 = vld [vmem:[#allocation2 + $0x14] sm:$0xf]
      %v1401 = vld [vmem:[#allocation2 + $0x24] sm:$0xf]
      %v1402 = vld [vmem:[#allocation2 + $0x34] sm:$0xf]
      %v1403 = vld [vmem:[#allocation2 + $0x44] sm:$0x7]
      %v1404 = vld [vmem:[%s5] sm:$0xf]
      %v1405 = vld [vmem:[%s5 + $0x4] sm:$0xf]
      %v1406 = vld [vmem:[%s5 + $0x8] sm:$0xf]
      %v1407 = vld [vmem:[%s5 + $0xc] sm:$0xf]
      %v1408 = vld [vmem:[%s5 + $0x10] sm:$0xf]
      %v1409 = vld [vmem:[%s5 + $0x14] sm:$0xf]
      %v1410 = vld [vmem:[%s5 + $0x18] sm:$0xf]
      %v1411 = vld [vmem:[%s5 + $0x1c] sm:$0xf]
      %v1412 = vld [vmem:[%s5 + $0x20] sm:$0xf]
      %v1413 = vld [vmem:[%s5 + $0x24] sm:$0xf]
      %v1414 = vld [vmem:[%s5 + $0x28] sm:$0xf]
      %v1415 = vld [vmem:[%s5 + $0x2c] sm:$0xf]
      %v1416 = vld [vmem:[%s5 + $0x30] sm:$0xf]
      %v1417 = vld [vmem:[%s5 + $0x34] sm:$0xf]
      %v1418 = vld [vmem:[%s5 + $0x38] sm:$0xf]
      %v1419 = vld [vmem:[%s5 + $0x3c] sm:$0xf]
      %v1425 = vunpack.c.l.b16 %v1399
      %v1426 = vunpack.c.l.b16 %v1400
      %v1427 = vunpack.c.l.b16 %v1401
      %v1428 = vunpack.c.l.b16 %v1402
      %v1429 = vunpack.c.l.b16 %v1403
      %v1430 = vpack.c.b16 %v1426, %v1425
      %v1431 = vpack.c.b16 %v1428, %v1427
      %v1432 = vpack.c.b16 %v1429, %v1429
      %vm1433 = vcmask 1044480
      %v1434 = vrot.slane %v1430, 3
      %v1435 = vrot.slane %v1431, 3
      %v1436 = vsel %vm1433, %v1434, %v1435
      %v1437 = vrot.slane %v1432, 3
      %v1438 = vsel %vm1433, %v1435, %v1437
      %v1457 = vunpack.c.l.b16 %v1404
      %v1458 = vunpack.c.l.b16 %v1405
      %v1459 = vunpack.c.l.b16 %v1406
      %v1460 = vunpack.c.l.b16 %v1407
      %v1461 = vunpack.c.l.b16 %v1408
      %v1462 = vunpack.c.l.b16 %v1409
      %v1463 = vunpack.c.l.b16 %v1410
      %v1464 = vunpack.c.l.b16 %v1411
      %v1465 = vunpack.c.l.b16 %v1412
      %v1466 = vunpack.c.l.b16 %v1413
      %v1467 = vunpack.c.l.b16 %v1414
      %v1468 = vunpack.c.l.b16 %v1415
      %v1469 = vunpack.c.l.b16 %v1416
      %v1470 = vunpack.c.l.b16 %v1417
      %v1471 = vunpack.c.l.b16 %v1418
      %v1472 = vunpack.c.l.b16 %v1419
      %v1473 = vpack.c.b16 %v1458, %v1457
      %v1474 = vpack.c.b16 %v1460, %v1459
      %v1475 = vpack.c.b16 %v1462, %v1461
      %v1476 = vpack.c.b16 %v1464, %v1463
      %v1477 = vpack.c.b16 %v1466, %v1465
      %v1478 = vpack.c.b16 %v1468, %v1467
      %v1479 = vpack.c.b16 %v1470, %v1469
      %v1480 = vpack.c.b16 %v1472, %v1471
      %1489 = vmatprep.subr.bf16.mxu0 0
      %1490 = vmatpush1.bf16.msra.mxu0 %v1480
      %1491 = vmatprep.subr.bf16.mxu0 0
      %1492 = vmatpush1.bf16.msra.mxu0 %v1479
      %1493 = vmatprep.subr.bf16.mxu0 0
      %1494 = vmatpush1.bf16.msra.mxu0 %v1478
      %1495 = vmatprep.subr.bf16.mxu0 0
      %1496 = vmatpush1.bf16.msra.mxu0 %v1477
      %1497 = vmatprep.subr.bf16.mxu0 0
      %1498 = vmatpush1.bf16.msra.mxu0 %v1476
      %1499 = vmatprep.subr.bf16.mxu0 0
      %1500 = vmatpush1.bf16.msra.mxu0 %v1475
      %1501 = vmatprep.subr.bf16.mxu0 0
      %1502 = vmatpush1.bf16.msra.mxu0 %v1474
      %1503 = vmatprep.subr.bf16.mxu0 0
      %1504 = vmatpush1.bf16.msra.mxu0 %v1473
      %1505 = vmatprep.subr.bf16.mxu0 0
      %1506 = vmatpush2.bf16.msra.mxu0 0
      %1507 = vmatprep.subr.bf16.mxu0 0
      %1508 = vmatpush2.bf16.msra.mxu0 0
      %1509 = vmatprep.subr.bf16.mxu0 0
      %1510 = vmatpush2.bf16.msra.mxu0 0
      %1511 = vmatprep.subr.bf16.mxu0 0
      %1512 = vmatpush2.bf16.msra.mxu0 0
      %1513 = vmatprep.subr.bf16.mxu0 0
      %1514 = vmatpush2.bf16.msra.mxu0 0
      %1515 = vmatprep.subr.bf16.mxu0 0
      %1516 = vmatpush2.bf16.msra.mxu0 0
      %1517 = vmatprep.subr.bf16.mxu0 0
      %1518 = vmatpush2.bf16.msra.mxu0 0
      %1519 = vmatprep.subr.bf16.mxu0 0
      %1520 = vmatpush2.bf16.msra.mxu0 0
      %1521 = vmatprep.mubr.bf16.mxu0 0
      %1522 = vmatmul.mubr.bf16.gmra.mxu0 %v1436
      %v1523 = vpop.f32.mrf.mxu0
      %v1524 = vadd.f32 0.0, %v1523
      %v1525 = vpop.f32.mrf.mxu0
      %v1526 = vpop.f32.mrf.mxu0
      %v1527 = vadd.f32 0.0, %v1526
      %v1528 = vpop.f32.mrf.mxu0
      %1529 = vmatprep.mubr.bf16.mxu0 0
      %1530 = vmatmul.mubr.bf16.gmra.mxu0 %v1438
      %v1531 = vpop.f32.mrf.mxu0
      %v1532 = vadd.f32 0.0, %v1531
      %v1533 = vpop.f32.mrf.mxu0
      %v1534 = vpop.f32.mrf.mxu0
      %v1535 = vadd.f32 0.0, %v1534
      %v1536 = vpop.f32.mrf.mxu0
      %1537 = vdwg.mxu0
      %v1538 = vadd.f32 %v1395, %v1524
      %v1539 = vadd.f32 %v1396, %v1527
      %v1540 = vadd.f32 %v1397, %v1532
      %v1541 = vadd.f32 %v1398, %v1535
      %v1542 = vld [vmem:[%s6] sm:$0x1]
      %v1544 = vlaneseq
      %v1545 = vshrl.u32 %v1544, 7
      %v1546 = vsub.s32 0, %v1545
      %v1547 = vrot.slane %v1542, %v1546
      %v1549 = vmul.f32 %v1538, %v1547
      %v1550 = vmul.f32 %v1539, %v1547
      %v1551 = vmul.f32 %v1540, %v1547
      %v1552 = vmul.f32 %v1541, %v1547
      %v1553 = vld [vmem:[%s7] sm:$0x1]
      %v1555 = vlaneseq
      %v1556 = vshrl.u32 %v1555, 7
      %v1557 = vsub.s32 0, %v1556
      %v1558 = vrot.slane %v1553, %v1557
      %v1560 = vadd.f32 %v1549, %v1558
      %v1561 = vadd.f32 %v1550, %v1558
      %v1562 = vadd.f32 %v1551, %v1558
      %v1563 = vadd.f32 %v1552, %v1558
      %v1564 = vmax.f32 %v1560, 0.0
      %v1565 = vmax.f32 %v1561, 0.0
      %v1566 = vmax.f32 %v1562, 0.0
      %v1567 = vmax.f32 %v1563, 0.0
      %v1568 = vpack.c.bf16 %v1565, %v1564
      %v1569 = vpack.c.bf16 %v1567, %v1566
      %v1570 = vld [vmem:[%s8] sm:$0xf]
      %v1571 = vld [vmem:[%s8 + $0x4] sm:$0xf]
      %v1572 = vld [vmem:[%s8 + $0x8] sm:$0xf]
      %v1573 = vld [vmem:[%s8 + $0xc] sm:$0xf]
      %v1574 = vld [vmem:[%s8 + $0x10] sm:$0xf]
      %v1575 = vld [vmem:[%s8 + $0x14] sm:$0xf]
      %v1576 = vld [vmem:[%s8 + $0x18] sm:$0xf]
      %v1577 = vld [vmem:[%s8 + $0x1c] sm:$0xf]
      %v1578 = vld [vmem:[%s8 + $0x20] sm:$0xf]
      %v1579 = vld [vmem:[%s8 + $0x24] sm:$0xf]
      %v1580 = vld [vmem:[%s8 + $0x28] sm:$0xf]
      %v1581 = vld [vmem:[%s8 + $0x2c] sm:$0xf]
      %v1582 = vld [vmem:[%s8 + $0x30] sm:$0xf]
      %v1583 = vld [vmem:[%s8 + $0x34] sm:$0xf]
      %v1584 = vld [vmem:[%s8 + $0x38] sm:$0xf]
      %v1585 = vld [vmem:[%s8 + $0x3c] sm:$0xf]
      %v1586 = vld [vmem:[%s9] sm:$0x1]
      %v1588 = vlaneseq
      %v1589 = vshrl.u32 %v1588, 7
      %v1590 = vsub.s32 0, %v1589
      %v1591 = vrot.slane %v1586, %v1590
      %v1609 = vunpack.c.l.b16 %v1570
      %v1610 = vunpack.c.l.b16 %v1571
      %v1611 = vunpack.c.l.b16 %v1572
      %v1612 = vunpack.c.l.b16 %v1573
      %v1613 = vunpack.c.l.b16 %v1574
      %v1614 = vunpack.c.l.b16 %v1575
      %v1615 = vunpack.c.l.b16 %v1576
      %v1616 = vunpack.c.l.b16 %v1577
      %v1617 = vunpack.c.l.b16 %v1578
      %v1618 = vunpack.c.l.b16 %v1579
      %v1619 = vunpack.c.l.b16 %v1580
      %v1620 = vunpack.c.l.b16 %v1581
      %v1621 = vunpack.c.l.b16 %v1582
      %v1622 = vunpack.c.l.b16 %v1583
      %v1623 = vunpack.c.l.b16 %v1584
      %v1624 = vunpack.c.l.b16 %v1585
      %v1625 = vpack.c.b16 %v1610, %v1609
      %v1626 = vpack.c.b16 %v1612, %v1611
      %v1627 = vpack.c.b16 %v1614, %v1613
      %v1628 = vpack.c.b16 %v1616, %v1615
      %v1629 = vpack.c.b16 %v1618, %v1617
      %v1630 = vpack.c.b16 %v1620, %v1619
      %v1631 = vpack.c.b16 %v1622, %v1621
      %v1632 = vpack.c.b16 %v1624, %v1623
      %1641 = vmatprep.subr.bf16.mxu0 0
      %1642 = vmatpush1.bf16.msra.mxu0 %v1632
      %1643 = vmatprep.subr.bf16.mxu0 0
      %1644 = vmatpush1.bf16.msra.mxu0 %v1631
      %1645 = vmatprep.subr.bf16.mxu0 0
      %1646 = vmatpush1.bf16.msra.mxu0 %v1630
      %1647 = vmatprep.subr.bf16.mxu0 0
      %1648 = vmatpush1.bf16.msra.mxu0 %v1629
      %1649 = vmatprep.subr.bf16.mxu0 0
      %1650 = vmatpush1.bf16.msra.mxu0 %v1628
      %1651 = vmatprep.subr.bf16.mxu0 0
      %1652 = vmatpush1.bf16.msra.mxu0 %v1627
      %1653 = vmatprep.subr.bf16.mxu0 0
      %1654 = vmatpush1.bf16.msra.mxu0 %v1626
      %1655 = vmatprep.subr.bf16.mxu0 0
      %1656 = vmatpush1.bf16.msra.mxu0 %v1625
      %1657 = vmatprep.subr.bf16.mxu0 0
      %1658 = vmatpush2.bf16.msra.mxu0 0
      %1659 = vmatprep.subr.bf16.mxu0 0
      %1660 = vmatpush2.bf16.msra.mxu0 0
      %1661 = vmatprep.subr.bf16.mxu0 0
      %1662 = vmatpush2.bf16.msra.mxu0 0
      %1663 = vmatprep.subr.bf16.mxu0 0
      %1664 = vmatpush2.bf16.msra.mxu0 0
      %1665 = vmatprep.subr.bf16.mxu0 0
      %1666 = vmatpush2.bf16.msra.mxu0 0
      %1667 = vmatprep.subr.bf16.mxu0 0
      %1668 = vmatpush2.bf16.msra.mxu0 0
      %1669 = vmatprep.subr.bf16.mxu0 0
      %1670 = vmatpush2.bf16.msra.mxu0 0
      %1671 = vmatprep.subr.bf16.mxu0 0
      %1672 = vmatpush2.bf16.msra.mxu0 0
      %1673 = vmatprep.mubr.bf16.mxu0 0
      %1674 = vmatmul.mubr.bf16.gmra.mxu0 %v1568
      %v1675 = vpop.f32.mrf.mxu0
      %v1676 = vadd.f32 %v1591, %v1675
      %v1677 = vpop.f32.mrf.mxu0
      %v1678 = vpop.f32.mrf.mxu0
      %v1679 = vadd.f32 %v1591, %v1678
      %v1680 = vpop.f32.mrf.mxu0
      %1681 = vmatprep.mubr.bf16.mxu0 0
      %1682 = vmatmul.mubr.bf16.gmra.mxu0 %v1569
      %v1683 = vpop.f32.mrf.mxu0
      %v1684 = vadd.f32 %v1591, %v1683
      %v1685 = vpop.f32.mrf.mxu0
      %v1686 = vpop.f32.mrf.mxu0
      %v1687 = vadd.f32 %v1591, %v1686
      %v1688 = vpop.f32.mrf.mxu0
      %1689 = vdwg.mxu0
      %1690 = vst [vmem:[%s478] sm:$0xff] %v1676
      %1691 = vst [vmem:[%s478 + $0x8] sm:$0xff] %v1679
      %1692 = vst [vmem:[%s478 + $0x10] sm:$0xff] %v1684
      %1693 = vst [vmem:[%s478 + $0x18] sm:$0xff] %v1687
      %s1694 = smul.u32 4, %s26
      %p1695 = scmp.lt.s32.totalorder %s25, 1
      %s1696 = scalar_select %p1695, %s25, 1
      %p1697 = scmp.lt.s32.totalorder %s1694, 3
      %s1698 = scalar_select %p1697, %s1694, 3
      %s1699 = smul.addr %s1696, 4
      %s1700 = sadd.s32 %s1698, %s1699
      %s1701 = smul.addr %s1700, 8
      %s1702 = scalar_lea.vmem %s10, %s1701
      // Predicated region
      $region61: #{conv_stem_forward.3} parent=59 // pred_check
        %p1703 = pneg %p281
      $region62: #{conv_stem_forward.3} parent=59 // pred_check_branch
        %1705 = sbr.rel (%p1703) target = $region64
      $region63: #{conv_stem_forward.3} parent=59 // pred_region
        %s1706 = smul.u32 4, %s26
      $region64: #{conv_stem_forward.3} parent=59 // pred_fallthru
        _
    $region60: #{conv_stem_forward.3} parent=5 // pred_fallthru
      _
    %p1707 = scmp.le.s32.totalorder 2, %s16
    // Predicated region
    $region65: #{conv_stem_forward.3} parent=5 // pred_check
      %p1708 = pneg %p1707
    $region66: #{conv_stem_forward.3} parent=5 // pred_check_branch
      %1710 = sbr.rel (%p1708) target = $region68
    $region67: #{conv_stem_forward.3} parent=5 // pred_region
      %s1711 = ssub.s32 %s16, 2
      // Predicated region
      $region69: #{conv_stem_forward.3} parent=67 // pred_check
        %p1712 = pneg %p287
      $region70: #{conv_stem_forward.3} parent=67 // pred_check_branch
        %1714 = sbr.rel (%p1712) target = $region72
      $region71: #{conv_stem_forward.3} parent=67 // pred_region
        %s1715 = smul.u32 4, %s28
        %p1716 = scmp.lt.s32.totalorder %s27, 1
        %s1717 = scalar_select %p1716, %s27, 1
        %p1718 = scmp.lt.s32.totalorder %s1715, 3
        %s1719 = scalar_select %p1718, %s1715, 3
        %s1720 = smul.addr %s1717, 4
        %s1721 = sadd.s32 %s1719, %s1720
        %s1722 = smul.addr %s1721, 8
        %s1723 = scalar_lea.vmem %s10, %s1722
      $region72: #{conv_stem_forward.3} parent=67 // pred_fallthru
        _
    $region68: #{conv_stem_forward.3} parent=5 // pred_fallthru
      _
  $region6: #{conv_stem_forward.3} parent=0 // loop_footer
    %s20 = sadd.s32 1, %s16
  $region7: #{conv_stem_forward.3} parent=0 // loop_footer_branch
    %15 = sbr.rel target = $region3
  $region8: #{conv_stem_forward.3} parent=0 // loop_exit
    _

</llo_original>
